<compile_context>
chip_gen: v6e
topology: v6e:2x2x1
jax: 0.10.0
libtpu: 0.0.40
codegen_flags: <defaults>
</compile_context>

<pallas_src>
import functools

import jax
import jax.numpy as jnp
from jax.experimental import pallas as pl
from jax.experimental.pallas import tpu as pltpu

LN_EPS = 1e-5  # torch.nn.LayerNorm default

# Row layout of the packed per-layer vector block (L, 8, P), P = max(C, Hm).
_ROW_LN1_G, _ROW_LN1_B, _ROW_BPROJ, _ROW_LN2_G, _ROW_LN2_B, _ROW_B1, _ROW_B2 = range(7)


def _stacked_layer_kernel(x_ref, vecs_ref, wqkv_ref, wproj_ref, w1_ref, w2_ref,
                          o_ref, *, num_heads: int):
    """Grid = (batch_block, layer). The activation lives in o_ref across the
    layer axis (output block index is layer-invariant => resident accumulator)."""
    layer = pl.program_id(1)

    # Seed the resident activation from the input on the first layer.
    @pl.when(layer == 0)
    def _():
        o_ref[...] = x_ref[...]

    BT, N, C = x_ref.shape
    Hm = w1_ref.shape[-1]
    H = num_heads
    D = C // H
    M = BT * N
    scale = D ** (-0.5)

    # Packed per-layer vectors (single block, single DMA).
    vecs = vecs_ref[0]                       # (8, P) f32
    ln1_g = vecs[_ROW_LN1_G, :C]
    ln1_b = vecs[_ROW_LN1_B, :C]
    bproj = vecs[_ROW_BPROJ, :C]
    ln2_g = vecs[_ROW_LN2_G, :C]
    ln2_b = vecs[_ROW_LN2_B, :C]
    b1 = vecs[_ROW_B1, :Hm]
    b2 = vecs[_ROW_B2, :C]

    x = o_ref[...].reshape(M, C)             # (M, C) f32, resident state

    # ---------------- LayerNorm 1 ----------------
    mu = jnp.mean(x, axis=-1, keepdims=True)
    var = jnp.mean(jnp.square(x - mu), axis=-1, keepdims=True)
    xn = (x - mu) * jax.lax.rsqrt(var + LN_EPS) * ln1_g + ln1_b

    # ---------------- fused QKV projection (bf16 in, f32 acc) ----------------
    qkv = jnp.dot(xn.astype(jnp.bfloat16), wqkv_ref[0],
                  preferred_element_type=jnp.float32)          # (M, 3C)
    q16 = (qkv[:, :C] * scale).astype(jnp.bfloat16)            # scale folded into q
    k16 = qkv[:, C:2 * C].astype(jnp.bfloat16)
    v16 = qkv[:, 2 * C:].astype(jnp.bfloat16)

    # ---------------- attention: per-head leading-batch einsums ----------------
    # No axis-0 concat of head-major copies; heads are lane slices of the fused
    # QKV result, each processed with a (BT,)-batched MXU contraction.
    ctx_heads = []
    for h in range(H):
        sl = slice(h * D, (h + 1) * D)
        qh = q16[:, sl].reshape(BT, N, D)
        kh = k16[:, sl].reshape(BT, N, D)
        vh = v16[:, sl].reshape(BT, N, D)
        s = jnp.einsum("bnd,bmd->bnm", qh, kh,
                       preferred_element_type=jnp.float32)     # (BT, N, N) f32
        s = s - jnp.max(s, axis=-1, keepdims=True)
        p = jnp.exp(s)
        p = p * pl.reciprocal(jnp.sum(p, axis=-1, keepdims=True), approx=True)
        c = jnp.einsum("bnm,bmd->bnd", p.astype(jnp.bfloat16), vh,
                       preferred_element_type=jnp.float32)     # (BT, N, D) f32
        ctx_heads.append(c.reshape(M, D))
    attn = jnp.concatenate(ctx_heads, axis=-1)                  # (M, C)

    attn = jnp.dot(attn.astype(jnp.bfloat16), wproj_ref[0],
                   preferred_element_type=jnp.float32) + bproj
    x = x + attn                                                # residual 1

    # ---------------- LayerNorm 2 + MLP ----------------
    mu2 = jnp.mean(x, axis=-1, keepdims=True)
    var2 = jnp.mean(jnp.square(x - mu2), axis=-1, keepdims=True)
    xn2 = (x - mu2) * jax.lax.rsqrt(var2 + LN_EPS) * ln2_g + ln2_b

    h1 = jnp.dot(xn2.astype(jnp.bfloat16), w1_ref[0],
                 preferred_element_type=jnp.float32) + b1
    h1 = jnp.maximum(h1, 0.0)
    mlp = jnp.dot(h1.astype(jnp.bfloat16), w2_ref[0],
                  preferred_element_type=jnp.float32) + b2

    o_ref[...] = (x + mlp).reshape(BT, N, C)                    # residual 2


# ------------------------- per-generation sizing -------------------------
def _tpu_vmem_and_cores():
    vmem_cap = 64 * 1024 * 1024           # conservative default (v7x: 64 MiB / TC)
    kind = ""
    try:
        vmem_cap = int(pltpu.get_tpu_info().vmem_capacity_bytes)
    except Exception:
        pass
    try:
        kind = jax.devices()[0].device_kind.lower()
    except Exception:
        pass
    two_cores = "v7" in kind              # v7x has 2 TensorCores per chip
    return vmem_cap, two_cores


def _pick_block_b(B, N, C, Hm, vmem_cap, two_cores):
    """Largest batch block that fits VMEM; keep >=2 blocks on v7x so the
    'parallel' batch axis shards across both TensorCores."""
    # per-layer bf16 weights, double-buffered along the layer axis
    w_bytes = 2 * 2 * (3 * C * C + C * C + 2 * C * Hm) + 2 * 4 * 8 * max(C, Hm)
    budget = int(0.7 * vmem_cap) - w_bytes
    min_blocks = 2 if (two_cores and B >= 2) else 1
    best = 1
    for bt in range(1, B + 1):
        if B % bt:
            continue
        if B // bt < min_blocks:
            continue
        # rough f32 working set: dbl-buffered input + resident output + qkv +
        # xn/attn temps + mlp hidden + per-head scores
        act = bt * N * 4 * (9 * C + Hm + N)
        if act <= budget:
            best = bt
    return best


def transformer_forward_pallas(x, stacked, num_heads, block_b=None,
                               vmem_limit_bytes=None):
    """x: (B, N, C) f32.  stacked: dict with per-layer weights stacked on axis 0:
    wqkv (L,C,3C), wproj (L,C,C), w1 (L,C,Hm), w2 (L,Hm,C), vecs (L,8,P)."""
    B, N, C = x.shape
    L = stacked["wqkv"].shape[0]
    Hm = stacked["w1"].shape[-1]
    P = stacked["vecs"].shape[-1]
    assert stacked["wqkv"].shape[-1] == 3 * C
    assert C % num_heads == 0

    vmem_cap, two_cores = _tpu_vmem_and_cores()
    if block_b is None:
        block_b = _pick_block_b(B, N, C, Hm, vmem_cap, two_cores)
    BT = block_b
    assert B % BT == 0

    if vmem_limit_bytes is None:
        # <= ~56 MiB on 64-MiB parts (v7x), ~112 MiB on 128-MiB parts (v5e/v6e)
        vmem_limit_bytes = max(32 * 1024 * 1024,
                               min(int(0.875 * vmem_cap), 112 * 1024 * 1024))

    xmap = lambda b, l: (b, 0, 0)      # batch block, layer-invariant (resident)
    wmap = lambda b, l: (l, 0, 0)      # weights pipelined along the layer axis

    in_specs = [
        pl.BlockSpec((BT, N, C), xmap),                 # x
        pl.BlockSpec((1, 8, P), wmap),                  # packed ln/bias vectors
        pl.BlockSpec((1, C, 3 * C), wmap),              # fused Wqkv
        pl.BlockSpec((1, C, C), wmap),                  # Wproj
        pl.BlockSpec((1, C, Hm), wmap),                 # W1
        pl.BlockSpec((1, Hm, C), wmap),                 # W2
    ]
    out_specs = pl.BlockSpec((BT, N, C), xmap)

    D = C // num_heads
    n_bblocks = B // BT
    flops = int(2 * B * N * L * (4 * C * C + 2 * C * Hm)
                + 4 * B * L * num_heads * N * N * D)
    transcendentals = int(B * L * num_heads * N * N)
    weight_bytes = sum(int(stacked[k].size) * stacked[k].dtype.itemsize
                       for k in ("wqkv", "wproj", "w1", "w2", "vecs"))
    bytes_accessed = int(n_bblocks * weight_bytes + 2 * x.size * x.dtype.itemsize)

    kernel = functools.partial(_stacked_layer_kernel, num_heads=num_heads)

    return pl.pallas_call(
        kernel,
        out_shape=jax.ShapeDtypeStruct((B, N, C), jnp.float32),
        grid_spec=pltpu.PrefetchScalarGridSpec(
            num_scalar_prefetch=0,
            grid=(n_bblocks, L),
            in_specs=in_specs,
            out_specs=out_specs,
        ),
        input_output_aliases={0: 0},    # x buffer donated to the output
        compiler_params=pltpu.CompilerParams(
            dimension_semantics=("parallel", "arbitrary"),
            vmem_limit_bytes=int(vmem_limit_bytes),
        ),
        cost_estimate=pl.CostEstimate(
            flops=flops,
            transcendentals=transcendentals,
            bytes_accessed=bytes_accessed,
        ),
    )(x, stacked["vecs"], stacked["wqkv"], stacked["wproj"],
      stacked["w1"], stacked["w2"])


# ------------------------- pure-JAX reference (same bf16 cast points) -------------------------
def _layer_ref(x, p, num_heads):
    B, N, C = x.shape
    H = num_heads
    D = C // H
    scale = D ** (-0.5)

    def ln(v, g, b):
        mu = jnp.mean(v, axis=-1, keepdims=True)
        var = jnp.mean(jnp.square(v - mu), axis=-1, keepdims=True)
        return (v - mu) * jax.lax.rsqrt(var + LN_EPS) * g + b

    xn = ln(x, p["ln1_g"], p["ln1_b"]).astype(jnp.bfloat16)
    q = jnp.einsum("bnc,cd->bnd", xn, p["wq"],
                   preferred_element_type=jnp.float32) * scale
    kv = jnp.einsum("bnc,cd->bnd", xn, p["wkv"],
                    preferred_element_type=jnp.float32)
    k, v = kv[..., :C], kv[..., C:]
    qh = q.reshape(B, N, H, D).astype(jnp.bfloat16)
    kh = k.reshape(B, N, H, D).astype(jnp.bfloat16)
    vh = v.reshape(B, N, H, D).astype(jnp.bfloat16)
    att = jnp.einsum("bnhd,bmhd->bnmh", qh, kh, preferred_element_type=jnp.float32)
    att = att - jnp.max(att, axis=2, keepdims=True)
    att = jnp.exp(att)
    att = att / jnp.sum(att, axis=2, keepdims=True)
    out = jnp.einsum("bnmh,bmhd->bnhd", att.astype(jnp.bfloat16), vh,
                     preferred_element_type=jnp.float32).reshape(B, N, C)
    out = jnp.einsum("bnc,cd->bnd", out.astype(jnp.bfloat16), p["wproj"],
                     preferred_element_type=jnp.float32) + p["bproj"]
    x = x + out
    xn2 = ln(x, p["ln2_g"], p["ln2_b"]).astype(jnp.bfloat16)
    h = jnp.einsum("bnc,ch->bnh", xn2, p["w1"],
                   preferred_element_type=jnp.float32) + p["b1"]
    h = jnp.maximum(h, 0.0).astype(jnp.bfloat16)
    mlp = jnp.einsum("bnh,hc->bnc", h, p["w2"],
                     preferred_element_type=jnp.float32) + p["b2"]
    return x + mlp


def transformer_forward_ref(x, layers_params, num_heads):
    for p in layers_params:
        x = _layer_ref(x, p, num_heads)
    return x


# ------------------------- parameter init / packing -------------------------
def init_layer_params(key, dim_self, mlp_ratio=2.0):
    C = dim_self
    Hm = int(C * mlp_ratio)
    ks = jax.random.split(key, 12)
    std = 0.02
    wf = lambda k, shape: (jax.random.normal(k, shape, jnp.float32) * std).astype(jnp.bfloat16)
    vf = lambda k, n: jax.random.normal(k, (n,), jnp.float32) * std
    return {
        "ln1_g": 1.0 + vf(ks[0], C),
        "ln1_b": vf(ks[1], C),
        "wq": wf(ks[2], (C, C)),            # bias=False (TransformerLayer default)
        "wkv": wf(ks[3], (C, 2 * C)),       # bias=False
        "wproj": wf(ks[4], (C, C)),
        "bproj": vf(ks[5], C),
        "ln2_g": 1.0 + vf(ks[6], C),
        "ln2_b": vf(ks[7], C),
        "w1": wf(ks[8], (C, Hm)),
        "b1": vf(ks[9], Hm),
        "w2": wf(ks[10], (Hm, C)),
        "b2": vf(ks[11], C),
    }


def stack_layers(layer_params_list):
    """Fuse Wq||Wkv into one (C,3C) weight and pack the 7 small vectors into a
    single (8, P) block per layer, then stack all layers on axis 0."""
    C = layer_params_list[0]["wq"].shape[0]
    Hm = layer_params_list[0]["w1"].shape[1]
    P = max(C, Hm)

    def pad(v):
        return jnp.pad(v.astype(jnp.float32), (0, P - v.shape[-1]))

    wqkv, wproj, w1, w2, vecs = [], [], [], [], []
    for p in layer_params_list:
        wqkv.append(jnp.concatenate([p["wq"], p["wkv"]], axis=-1))
        wproj.append(p["wproj"])
        w1.append(p["w1"])
        w2.append(p["w2"])
        vecs.append(jnp.stack(
            [pad(p["ln1_g"]), pad(p["ln1_b"]), pad(p["bproj"]),
             pad(p["ln2_g"]), pad(p["ln2_b"]), pad(p["b1"]), pad(p["b2"]),
             jnp.zeros((P,), jnp.float32)], axis=0))
    return {
        "wqkv": jnp.stack(wqkv, axis=0),    # (L, C, 3C) bf16
        "wproj": jnp.stack(wproj, axis=0),  # (L, C, C)  bf16
        "w1": jnp.stack(w1, axis=0),        # (L, C, Hm) bf16
        "w2": jnp.stack(w2, axis=0),        # (L, Hm, C) bf16
        "vecs": jnp.stack(vecs, axis=0),    # (L, 8, P)  f32
    }


if __name__ == "__main__":
    # Small shapes: batch=2, seq=8, dim_self=32, num_heads=4, num_layers=2
    B, N, C = 2, 8, 32
    num_heads = 4
    num_layers = 2

    key = jax.random.PRNGKey(0)
    kx, *kls = jax.random.split(key, 1 + num_layers)
    x = jax.random.normal(kx, (B, N, C), jnp.float32)
    layers_params = [init_layer_params(k, C, mlp_ratio=2.0) for k in kls]
    stacked = stack_layers(layers_params)

    # Reference first (the kernel aliases/donates the x buffer).
    ref = transformer_forward_ref(x, layers_params, num_heads)
    ref = jax.block_until_ready(ref)

    out = transformer_forward_pallas(x, stacked, num_heads)
    out = jax.block_until_ready(out)

    assert out.shape == (B, N, C)
    assert jnp.allclose(out, ref, atol=5e-3, rtol=5e-3), "mismatch vs reference"

    print("KERNEL_OK")
</pallas_src>

<mosaic_0001>
module attributes {stable_mosaic.version = 11 : i64} {
  func.func @_stacked_layer_kernel(%arg0: i32, %arg1: i32, %arg2: memref<2x8x32xf32, #tpu.memory_space<vmem>>, %arg3: memref<1x8x64xf32, #tpu.memory_space<vmem>>, %arg4: memref<1x32x96xbf16, #tpu.memory_space<vmem>>, %arg5: memref<1x32x32xbf16, #tpu.memory_space<vmem>>, %arg6: memref<1x32x64xbf16, #tpu.memory_space<vmem>>, %arg7: memref<1x64x32xbf16, #tpu.memory_space<vmem>>, %arg8: memref<2x8x32xf32, #tpu.memory_space<vmem>>) attributes {dimension_semantics = [#tpu.dimension_semantics<parallel>, #tpu.dimension_semantics<arbitrary>], iteration_bounds = array<i64: 1, 2>, scalar_prefetch = 0 : i64, scratch_operands = 0 : i64, tpu.core_type = #tpu.core_type<tc>, window_params = [{transform_indices = @transform_0, window_bounds = array<i64: 2, 8, 32>}, {transform_indices = @transform_1, window_bounds = array<i64: 1, 8, 64>}, {transform_indices = @transform_2, window_bounds = array<i64: 1, 32, 96>}, {transform_indices = @transform_3, window_bounds = array<i64: 1, 32, 32>}, {transform_indices = @transform_4, window_bounds = array<i64: 1, 32, 64>}, {transform_indices = @transform_5, window_bounds = array<i64: 1, 64, 32>}, {transform_indices = @transform_6, window_bounds = array<i64: 2, 8, 32>}]} {
    %c0_i32 = arith.constant 0 : i32
    %0 = arith.cmpi eq, %arg1, %c0_i32 : i32
    %1 = arith.extui %0 : i1 to i32
    %c0_i32_0 = arith.constant 0 : i32
    %2 = arith.cmpi ne, %1, %c0_i32_0 : i32
    scf.if %2 {
      %c0_52 = arith.constant 0 : index
      %c0_53 = arith.constant 0 : index
      %c0_54 = arith.constant 0 : index
      %189 = vector.load %arg2[%c0_52, %c0_53, %c0_54] : memref<2x8x32xf32, #tpu.memory_space<vmem>>, vector<2x8x32xf32>
      %c0_55 = arith.constant 0 : index
      %c0_56 = arith.constant 0 : index
      %c0_57 = arith.constant 0 : index
      %190 = vector.load %arg8[%c0_55, %c0_56, %c0_57] : memref<2x8x32xf32, #tpu.memory_space<vmem>>, vector<2x8x32xf32>
      tpu.vector_store %arg8[%c0_55, %c0_56, %c0_57], %189 {strides = array<i32>} : memref<2x8x32xf32, #tpu.memory_space<vmem>>, vector<2x8x32xf32>,
    } else {
    }
    %c0 = arith.constant 0 : index
    %c0_1 = arith.constant 0 : index
    %c0_2 = arith.constant 0 : index
    %3 = vector.load %arg3[%c0, %c0_1, %c0_2] : memref<1x8x64xf32, #tpu.memory_space<vmem>>, vector<1x8x64xf32>
    %4 = vector.shape_cast %3 : vector<1x8x64xf32> to vector<8x64xf32>
    %5 = vector.extract_strided_slice %4 {offsets = [0, 0], sizes = [1, 32], strides = [1, 1]} : vector<8x64xf32> to vector<1x32xf32>
    %6 = vector.shape_cast %5 : vector<1x32xf32> to vector<32xf32>
    %7 = vector.extract_strided_slice %4 {offsets = [1, 0], sizes = [1, 32], strides = [1, 1]} : vector<8x64xf32> to vector<1x32xf32>
    %8 = vector.shape_cast %7 : vector<1x32xf32> to vector<32xf32>
    %9 = vector.extract_strided_slice %4 {offsets = [2, 0], sizes = [1, 32], strides = [1, 1]} : vector<8x64xf32> to vector<1x32xf32>
    %10 = vector.shape_cast %9 : vector<1x32xf32> to vector<32xf32>
    %11 = vector.extract_strided_slice %4 {offsets = [3, 0], sizes = [1, 32], strides = [1, 1]} : vector<8x64xf32> to vector<1x32xf32>
    %12 = vector.shape_cast %11 : vector<1x32xf32> to vector<32xf32>
    %13 = vector.extract_strided_slice %4 {offsets = [4, 0], sizes = [1, 32], strides = [1, 1]} : vector<8x64xf32> to vector<1x32xf32>
    %14 = vector.shape_cast %13 : vector<1x32xf32> to vector<32xf32>
    %15 = vector.extract_strided_slice %4 {offsets = [5, 0], sizes = [1, 64], strides = [1, 1]} : vector<8x64xf32> to vector<1x64xf32>
    %16 = vector.shape_cast %15 : vector<1x64xf32> to vector<64xf32>
    %17 = vector.extract_strided_slice %4 {offsets = [6, 0], sizes = [1, 32], strides = [1, 1]} : vector<8x64xf32> to vector<1x32xf32>
    %18 = vector.shape_cast %17 : vector<1x32xf32> to vector<32xf32>
    %c0_3 = arith.constant 0 : index
    %c0_4 = arith.constant 0 : index
    %c0_5 = arith.constant 0 : index
    %19 = vector.load %arg8[%c0_3, %c0_4, %c0_5] : memref<2x8x32xf32, #tpu.memory_space<vmem>>, vector<2x8x32xf32>
    %20 = vector.shape_cast %19 : vector<2x8x32xf32> to vector<16x32xf32>
    %cst = arith.constant dense<0.000000e+00> : vector<16xf32>
    %21 = vector.multi_reduction <add>, %20, %cst [1] : vector<16x32xf32> to vector<16xf32>
    %22 = vector.shape_cast %21 : vector<16xf32> to vector<16x1xf32>
    %cst_6 = arith.constant 3.200000e+01 : f32
    %23 = vector.broadcast %cst_6 : f32 to vector<16x1xf32>
    %24 = arith.divf %22, %23 : vector<16x1xf32>
    %25 = vector.broadcast %24 : vector<16x1xf32> to vector<16x32xf32>
    %26 = arith.subf %20, %25 : vector<16x32xf32>
    %27 = arith.mulf %26, %26 : vector<16x32xf32>
    %cst_7 = arith.constant dense<0.000000e+00> : vector<16xf32>
    %28 = vector.multi_reduction <add>, %27, %cst_7 [1] : vector<16x32xf32> to vector<16xf32>
    %29 = vector.shape_cast %28 : vector<16xf32> to vector<16x1xf32>
    %cst_8 = arith.constant 3.200000e+01 : f32
    %30 = vector.broadcast %cst_8 : f32 to vector<16x1xf32>
    %31 = arith.divf %29, %30 : vector<16x1xf32>
    %32 = vector.broadcast %24 : vector<16x1xf32> to vector<16x32xf32>
    %33 = arith.subf %20, %32 : vector<16x32xf32>
    %cst_9 = arith.constant 9.99999974E-6 : f32
    %34 = vector.broadcast %cst_9 : f32 to vector<16x1xf32>
    %35 = arith.addf %31, %34 : vector<16x1xf32>
    %36 = math.rsqrt %35 : vector<16x1xf32>
    %37 = vector.broadcast %36 : vector<16x1xf32> to vector<16x32xf32>
    %38 = arith.mulf %33, %37 : vector<16x32xf32>
    %39 = vector.shape_cast %6 : vector<32xf32> to vector<1x32xf32>
    %40 = vector.broadcast %39 : vector<1x32xf32> to vector<16x32xf32>
    %41 = arith.mulf %38, %40 : vector<16x32xf32>
    %42 = vector.shape_cast %8 : vector<32xf32> to vector<1x32xf32>
    %43 = vector.broadcast %42 : vector<1x32xf32> to vector<16x32xf32>
    %44 = arith.addf %41, %43 : vector<16x32xf32>
    %45 = arith.truncf %44 : vector<16x32xf32> to vector<16x32xbf16>
    %c0_10 = arith.constant 0 : index
    %c0_11 = arith.constant 0 : index
    %c0_12 = arith.constant 0 : index
    %46 = vector.load %arg4[%c0_10, %c0_11, %c0_12] : memref<1x32x96xbf16, #tpu.memory_space<vmem>>, vector<1x32x96xbf16>
    %47 = vector.shape_cast %46 : vector<1x32x96xbf16> to vector<32x96xbf16>
    %cst_13 = arith.constant dense<0.000000e+00> : vector<16x96xf32>
    %48 = tpu.matmul %45, %47, %cst_13 {dimension_numbers = #tpu.dot_dimension_numbers<[1], [0], [0], [1], [0, 0, 1, 1], [], []>} : vector<16x32xbf16>, vector<32x96xbf16>, vector<16x96xf32> -> vector<16x96xf32>
    %49 = vector.extract_strided_slice %48 {offsets = [0, 0], sizes = [16, 32], strides = [1, 1]} : vector<16x96xf32> to vector<16x32xf32>
    %cst_14 = arith.constant 0.353553385 : f32
    %50 = vector.broadcast %cst_14 : f32 to vector<16x32xf32>
    %51 = arith.mulf %49, %50 : vector<16x32xf32>
    %52 = arith.truncf %51 : vector<16x32xf32> to vector<16x32xbf16>
    %53 = vector.extract_strided_slice %48 {offsets = [0, 32], sizes = [16, 32], strides = [1, 1]} : vector<16x96xf32> to vector<16x32xf32>
    %54 = arith.truncf %53 : vector<16x32xf32> to vector<16x32xbf16>
    %55 = vector.extract_strided_slice %48 {offsets = [0, 64], sizes = [16, 32], strides = [1, 1]} : vector<16x96xf32> to vector<16x32xf32>
    %56 = arith.truncf %55 : vector<16x32xf32> to vector<16x32xbf16>
    %57 = vector.extract_strided_slice %52 {offsets = [0, 0], sizes = [16, 8], strides = [1, 1]} : vector<16x32xbf16> to vector<16x8xbf16>
    %58 = vector.shape_cast %57 : vector<16x8xbf16> to vector<2x8x8xbf16>
    %59 = vector.extract_strided_slice %54 {offsets = [0, 0], sizes = [16, 8], strides = [1, 1]} : vector<16x32xbf16> to vector<16x8xbf16>
    %60 = vector.shape_cast %59 : vector<16x8xbf16> to vector<2x8x8xbf16>
    %61 = vector.extract_strided_slice %56 {offsets = [0, 0], sizes = [16, 8], strides = [1, 1]} : vector<16x32xbf16> to vector<16x8xbf16>
    %62 = vector.shape_cast %61 : vector<16x8xbf16> to vector<2x8x8xbf16>
    "tpu.trace_start"() <{level = 10 : i32, message = "bnd,bmd->bnm"}> : () -> ()
    %cst_15 = arith.constant dense<0.000000e+00> : vector<2x8x8xf32>
    %63 = tpu.matmul %58, %60, %cst_15 {dimension_numbers = #tpu.dot_dimension_numbers<[2], [2], [1], [1], [0, 0, 0, 1, 1, 1], [0], [0]>} : vector<2x8x8xbf16>, vector<2x8x8xbf16>, vector<2x8x8xf32> -> vector<2x8x8xf32>
    "tpu.trace_stop"() : () -> ()
    %cst_16 = arith.constant dense<0xFF800000> : vector<2x8xf32>
    %64 = vector.multi_reduction <maximumf>, %63, %cst_16 [2] : vector<2x8x8xf32> to vector<2x8xf32>
    %65 = vector.shape_cast %64 : vector<2x8xf32> to vector<2x8x1xf32>
    %66 = vector.broadcast %65 : vector<2x8x1xf32> to vector<2x8x8xf32>
    %67 = arith.subf %63, %66 : vector<2x8x8xf32>
    %68 = math.exp %67 : vector<2x8x8xf32>
    %cst_17 = arith.constant dense<0.000000e+00> : vector<2x8xf32>
    %69 = vector.multi_reduction <add>, %68, %cst_17 [2] : vector<2x8x8xf32> to vector<2x8xf32>
    %70 = vector.shape_cast %69 : vector<2x8xf32> to vector<2x8x1xf32>
    %71 = tpu.reciprocal %70 {approx = true} : vector<2x8x1xf32> -> vector<2x8x1xf32>
    %72 = vector.broadcast %71 : vector<2x8x1xf32> to vector<2x8x8xf32>
    %73 = arith.mulf %68, %72 : vector<2x8x8xf32>
    %74 = arith.truncf %73 : vector<2x8x8xf32> to vector<2x8x8xbf16>
    "tpu.trace_start"() <{level = 10 : i32, message = "bnm,bmd->bnd"}> : () -> ()
    %cst_18 = arith.constant dense<0.000000e+00> : vector<2x8x8xf32>
    %75 = tpu.matmul %74, %62, %cst_18 {dimension_numbers = #tpu.dot_dimension_numbers<[2], [1], [1], [2], [0, 0, 0, 1, 1, 2], [0], [0]>} : vector<2x8x8xbf16>, vector<2x8x8xbf16>, vector<2x8x8xf32> -> vector<2x8x8xf32>
    "tpu.trace_stop"() : () -> ()
    %76 = vector.shape_cast %75 : vector<2x8x8xf32> to vector<16x8xf32>
    %77 = vector.extract_strided_slice %52 {offsets = [0, 8], sizes = [16, 8], strides = [1, 1]} : vector<16x32xbf16> to vector<16x8xbf16>
    %78 = vector.shape_cast %77 : vector<16x8xbf16> to vector<2x8x8xbf16>
    %79 = vector.extract_strided_slice %54 {offsets = [0, 8], sizes = [16, 8], strides = [1, 1]} : vector<16x32xbf16> to vector<16x8xbf16>
    %80 = vector.shape_cast %79 : vector<16x8xbf16> to vector<2x8x8xbf16>
    %81 = vector.extract_strided_slice %56 {offsets = [0, 8], sizes = [16, 8], strides = [1, 1]} : vector<16x32xbf16> to vector<16x8xbf16>
    %82 = vector.shape_cast %81 : vector<16x8xbf16> to vector<2x8x8xbf16>
    "tpu.trace_start"() <{level = 10 : i32, message = "bnd,bmd->bnm"}> : () -> ()
    %cst_19 = arith.constant dense<0.000000e+00> : vector<2x8x8xf32>
    %83 = tpu.matmul %78, %80, %cst_19 {dimension_numbers = #tpu.dot_dimension_numbers<[2], [2], [1], [1], [0, 0, 0, 1, 1, 1], [0], [0]>} : vector<2x8x8xbf16>, vector<2x8x8xbf16>, vector<2x8x8xf32> -> vector<2x8x8xf32>
    "tpu.trace_stop"() : () -> ()
    %cst_20 = arith.constant dense<0xFF800000> : vector<2x8xf32>
    %84 = vector.multi_reduction <maximumf>, %83, %cst_20 [2] : vector<2x8x8xf32> to vector<2x8xf32>
    %85 = vector.shape_cast %84 : vector<2x8xf32> to vector<2x8x1xf32>
    %86 = vector.broadcast %85 : vector<2x8x1xf32> to vector<2x8x8xf32>
    %87 = arith.subf %83, %86 : vector<2x8x8xf32>
    %88 = math.exp %87 : vector<2x8x8xf32>
    %cst_21 = arith.constant dense<0.000000e+00> : vector<2x8xf32>
    %89 = vector.multi_reduction <add>, %88, %cst_21 [2] : vector<2x8x8xf32> to vector<2x8xf32>
    %90 = vector.shape_cast %89 : vector<2x8xf32> to vector<2x8x1xf32>
    %91 = tpu.reciprocal %90 {approx = true} : vector<2x8x1xf32> -> vector<2x8x1xf32>
    %92 = vector.broadcast %91 : vector<2x8x1xf32> to vector<2x8x8xf32>
    %93 = arith.mulf %88, %92 : vector<2x8x8xf32>
    %94 = arith.truncf %93 : vector<2x8x8xf32> to vector<2x8x8xbf16>
    "tpu.trace_start"() <{level = 10 : i32, message = "bnm,bmd->bnd"}> : () -> ()
    %cst_22 = arith.constant dense<0.000000e+00> : vector<2x8x8xf32>
    %95 = tpu.matmul %94, %82, %cst_22 {dimension_numbers = #tpu.dot_dimension_numbers<[2], [1], [1], [2], [0, 0, 0, 1, 1, 2], [0], [0]>} : vector<2x8x8xbf16>, vector<2x8x8xbf16>, vector<2x8x8xf32> -> vector<2x8x8xf32>
    "tpu.trace_stop"() : () -> ()
    %96 = vector.shape_cast %95 : vector<2x8x8xf32> to vector<16x8xf32>
    %97 = vector.extract_strided_slice %52 {offsets = [0, 16], sizes = [16, 8], strides = [1, 1]} : vector<16x32xbf16> to vector<16x8xbf16>
    %98 = vector.shape_cast %97 : vector<16x8xbf16> to vector<2x8x8xbf16>
    %99 = vector.extract_strided_slice %54 {offsets = [0, 16], sizes = [16, 8], strides = [1, 1]} : vector<16x32xbf16> to vector<16x8xbf16>
    %100 = vector.shape_cast %99 : vector<16x8xbf16> to vector<2x8x8xbf16>
    %101 = vector.extract_strided_slice %56 {offsets = [0, 16], sizes = [16, 8], strides = [1, 1]} : vector<16x32xbf16> to vector<16x8xbf16>
    %102 = vector.shape_cast %101 : vector<16x8xbf16> to vector<2x8x8xbf16>
    "tpu.trace_start"() <{level = 10 : i32, message = "bnd,bmd->bnm"}> : () -> ()
    %cst_23 = arith.constant dense<0.000000e+00> : vector<2x8x8xf32>
    %103 = tpu.matmul %98, %100, %cst_23 {dimension_numbers = #tpu.dot_dimension_numbers<[2], [2], [1], [1], [0, 0, 0, 1, 1, 1], [0], [0]>} : vector<2x8x8xbf16>, vector<2x8x8xbf16>, vector<2x8x8xf32> -> vector<2x8x8xf32>
    "tpu.trace_stop"() : () -> ()
    %cst_24 = arith.constant dense<0xFF800000> : vector<2x8xf32>
    %104 = vector.multi_reduction <maximumf>, %103, %cst_24 [2] : vector<2x8x8xf32> to vector<2x8xf32>
    %105 = vector.shape_cast %104 : vector<2x8xf32> to vector<2x8x1xf32>
    %106 = vector.broadcast %105 : vector<2x8x1xf32> to vector<2x8x8xf32>
    %107 = arith.subf %103, %106 : vector<2x8x8xf32>
    %108 = math.exp %107 : vector<2x8x8xf32>
    %cst_25 = arith.constant dense<0.000000e+00> : vector<2x8xf32>
    %109 = vector.multi_reduction <add>, %108, %cst_25 [2] : vector<2x8x8xf32> to vector<2x8xf32>
    %110 = vector.shape_cast %109 : vector<2x8xf32> to vector<2x8x1xf32>
    %111 = tpu.reciprocal %110 {approx = true} : vector<2x8x1xf32> -> vector<2x8x1xf32>
    %112 = vector.broadcast %111 : vector<2x8x1xf32> to vector<2x8x8xf32>
    %113 = arith.mulf %108, %112 : vector<2x8x8xf32>
    %114 = arith.truncf %113 : vector<2x8x8xf32> to vector<2x8x8xbf16>
    "tpu.trace_start"() <{level = 10 : i32, message = "bnm,bmd->bnd"}> : () -> ()
    %cst_26 = arith.constant dense<0.000000e+00> : vector<2x8x8xf32>
    %115 = tpu.matmul %114, %102, %cst_26 {dimension_numbers = #tpu.dot_dimension_numbers<[2], [1], [1], [2], [0, 0, 0, 1, 1, 2], [0], [0]>} : vector<2x8x8xbf16>, vector<2x8x8xbf16>, vector<2x8x8xf32> -> vector<2x8x8xf32>
    "tpu.trace_stop"() : () -> ()
    %116 = vector.shape_cast %115 : vector<2x8x8xf32> to vector<16x8xf32>
    %117 = vector.extract_strided_slice %52 {offsets = [0, 24], sizes = [16, 8], strides = [1, 1]} : vector<16x32xbf16> to vector<16x8xbf16>
    %118 = vector.shape_cast %117 : vector<16x8xbf16> to vector<2x8x8xbf16>
    %119 = vector.extract_strided_slice %54 {offsets = [0, 24], sizes = [16, 8], strides = [1, 1]} : vector<16x32xbf16> to vector<16x8xbf16>
    %120 = vector.shape_cast %119 : vector<16x8xbf16> to vector<2x8x8xbf16>
    %121 = vector.extract_strided_slice %56 {offsets = [0, 24], sizes = [16, 8], strides = [1, 1]} : vector<16x32xbf16> to vector<16x8xbf16>
    %122 = vector.shape_cast %121 : vector<16x8xbf16> to vector<2x8x8xbf16>
    "tpu.trace_start"() <{level = 10 : i32, message = "bnd,bmd->bnm"}> : () -> ()
    %cst_27 = arith.constant dense<0.000000e+00> : vector<2x8x8xf32>
    %123 = tpu.matmul %118, %120, %cst_27 {dimension_numbers = #tpu.dot_dimension_numbers<[2], [2], [1], [1], [0, 0, 0, 1, 1, 1], [0], [0]>} : vector<2x8x8xbf16>, vector<2x8x8xbf16>, vector<2x8x8xf32> -> vector<2x8x8xf32>
    "tpu.trace_stop"() : () -> ()
    %cst_28 = arith.constant dense<0xFF800000> : vector<2x8xf32>
    %124 = vector.multi_reduction <maximumf>, %123, %cst_28 [2] : vector<2x8x8xf32> to vector<2x8xf32>
    %125 = vector.shape_cast %124 : vector<2x8xf32> to vector<2x8x1xf32>
    %126 = vector.broadcast %125 : vector<2x8x1xf32> to vector<2x8x8xf32>
    %127 = arith.subf %123, %126 : vector<2x8x8xf32>
    %128 = math.exp %127 : vector<2x8x8xf32>
    %cst_29 = arith.constant dense<0.000000e+00> : vector<2x8xf32>
    %129 = vector.multi_reduction <add>, %128, %cst_29 [2] : vector<2x8x8xf32> to vector<2x8xf32>
    %130 = vector.shape_cast %129 : vector<2x8xf32> to vector<2x8x1xf32>
    %131 = tpu.reciprocal %130 {approx = true} : vector<2x8x1xf32> -> vector<2x8x1xf32>
    %132 = vector.broadcast %131 : vector<2x8x1xf32> to vector<2x8x8xf32>
    %133 = arith.mulf %128, %132 : vector<2x8x8xf32>
    %134 = arith.truncf %133 : vector<2x8x8xf32> to vector<2x8x8xbf16>
    "tpu.trace_start"() <{level = 10 : i32, message = "bnm,bmd->bnd"}> : () -> ()
    %cst_30 = arith.constant dense<0.000000e+00> : vector<2x8x8xf32>
    %135 = tpu.matmul %134, %122, %cst_30 {dimension_numbers = #tpu.dot_dimension_numbers<[2], [1], [1], [2], [0, 0, 0, 1, 1, 2], [0], [0]>} : vector<2x8x8xbf16>, vector<2x8x8xbf16>, vector<2x8x8xf32> -> vector<2x8x8xf32>
    "tpu.trace_stop"() : () -> ()
    %136 = vector.shape_cast %135 : vector<2x8x8xf32> to vector<16x8xf32>
    %137 = tpu.concatenate %76, %96, %116, %136 in 1 : vector<16x8xf32>, vector<16x8xf32>, vector<16x8xf32>, vector<16x8xf32> -> vector<16x32xf32>
    %138 = arith.truncf %137 : vector<16x32xf32> to vector<16x32xbf16>
    %c0_31 = arith.constant 0 : index
    %c0_32 = arith.constant 0 : index
    %c0_33 = arith.constant 0 : index
    %139 = vector.load %arg5[%c0_31, %c0_32, %c0_33] : memref<1x32x32xbf16, #tpu.memory_space<vmem>>, vector<1x32x32xbf16>
    %140 = vector.shape_cast %139 : vector<1x32x32xbf16> to vector<32x32xbf16>
    %cst_34 = arith.constant dense<0.000000e+00> : vector<16x32xf32>
    %141 = tpu.matmul %138, %140, %cst_34 {dimension_numbers = #tpu.dot_dimension_numbers<[1], [0], [0], [1], [0, 0, 1, 1], [], []>} : vector<16x32xbf16>, vector<32x32xbf16>, vector<16x32xf32> -> vector<16x32xf32>
    %142 = vector.shape_cast %10 : vector<32xf32> to vector<1x32xf32>
    %143 = vector.broadcast %142 : vector<1x32xf32> to vector<16x32xf32>
    %144 = arith.addf %141, %143 : vector<16x32xf32>
    %145 = arith.addf %20, %144 : vector<16x32xf32>
    %cst_35 = arith.constant dense<0.000000e+00> : vector<16xf32>
    %146 = vector.multi_reduction <add>, %145, %cst_35 [1] : vector<16x32xf32> to vector<16xf32>
    %147 = vector.shape_cast %146 : vector<16xf32> to vector<16x1xf32>
    %cst_36 = arith.constant 3.200000e+01 : f32
    %148 = vector.broadcast %cst_36 : f32 to vector<16x1xf32>
    %149 = arith.divf %147, %148 : vector<16x1xf32>
    %150 = vector.broadcast %149 : vector<16x1xf32> to vector<16x32xf32>
    %151 = arith.subf %145, %150 : vector<16x32xf32>
    %152 = arith.mulf %151, %151 : vector<16x32xf32>
    %cst_37 = arith.constant dense<0.000000e+00> : vector<16xf32>
    %153 = vector.multi_reduction <add>, %152, %cst_37 [1] : vector<16x32xf32> to vector<16xf32>
    %154 = vector.shape_cast %153 : vector<16xf32> to vector<16x1xf32>
    %cst_38 = arith.constant 3.200000e+01 : f32
    %155 = vector.broadcast %cst_38 : f32 to vector<16x1xf32>
    %156 = arith.divf %154, %155 : vector<16x1xf32>
    %157 = vector.broadcast %149 : vector<16x1xf32> to vector<16x32xf32>
    %158 = arith.subf %145, %157 : vector<16x32xf32>
    %cst_39 = arith.constant 9.99999974E-6 : f32
    %159 = vector.broadcast %cst_39 : f32 to vector<16x1xf32>
    %160 = arith.addf %156, %159 : vector<16x1xf32>
    %161 = math.rsqrt %160 : vector<16x1xf32>
    %162 = vector.broadcast %161 : vector<16x1xf32> to vector<16x32xf32>
    %163 = arith.mulf %158, %162 : vector<16x32xf32>
    %164 = vector.shape_cast %12 : vector<32xf32> to vector<1x32xf32>
    %165 = vector.broadcast %164 : vector<1x32xf32> to vector<16x32xf32>
    %166 = arith.mulf %163, %165 : vector<16x32xf32>
    %167 = vector.shape_cast %14 : vector<32xf32> to vector<1x32xf32>
    %168 = vector.broadcast %167 : vector<1x32xf32> to vector<16x32xf32>
    %169 = arith.addf %166, %168 : vector<16x32xf32>
    %170 = arith.truncf %169 : vector<16x32xf32> to vector<16x32xbf16>
    %c0_40 = arith.constant 0 : index
    %c0_41 = arith.constant 0 : index
    %c0_42 = arith.constant 0 : index
    %171 = vector.load %arg6[%c0_40, %c0_41, %c0_42] : memref<1x32x64xbf16, #tpu.memory_space<vmem>>, vector<1x32x64xbf16>
    %172 = vector.shape_cast %171 : vector<1x32x64xbf16> to vector<32x64xbf16>
    %cst_43 = arith.constant dense<0.000000e+00> : vector<16x64xf32>
    %173 = tpu.matmul %170, %172, %cst_43 {dimension_numbers = #tpu.dot_dimension_numbers<[1], [0], [0], [1], [0, 0, 1, 1], [], []>} : vector<16x32xbf16>, vector<32x64xbf16>, vector<16x64xf32> -> vector<16x64xf32>
    %174 = vector.shape_cast %16 : vector<64xf32> to vector<1x64xf32>
    %175 = vector.broadcast %174 : vector<1x64xf32> to vector<16x64xf32>
    %176 = arith.addf %173, %175 : vector<16x64xf32>
    %cst_44 = arith.constant 0.000000e+00 : f32
    %177 = vector.broadcast %cst_44 : f32 to vector<16x64xf32>
    %178 = arith.maximumf %176, %177 : vector<16x64xf32>
    %179 = arith.truncf %178 : vector<16x64xf32> to vector<16x64xbf16>
    %c0_45 = arith.constant 0 : index
    %c0_46 = arith.constant 0 : index
    %c0_47 = arith.constant 0 : index
    %180 = vector.load %arg7[%c0_45, %c0_46, %c0_47] : memref<1x64x32xbf16, #tpu.memory_space<vmem>>, vector<1x64x32xbf16>
    %181 = vector.shape_cast %180 : vector<1x64x32xbf16> to vector<64x32xbf16>
    %cst_48 = arith.constant dense<0.000000e+00> : vector<16x32xf32>
    %182 = tpu.matmul %179, %181, %cst_48 {dimension_numbers = #tpu.dot_dimension_numbers<[1], [0], [0], [1], [0, 0, 1, 1], [], []>} : vector<16x64xbf16>, vector<64x32xbf16>, vector<16x32xf32> -> vector<16x32xf32>
    %183 = vector.shape_cast %18 : vector<32xf32> to vector<1x32xf32>
    %184 = vector.broadcast %183 : vector<1x32xf32> to vector<16x32xf32>
    %185 = arith.addf %182, %184 : vector<16x32xf32>
    %186 = arith.addf %145, %185 : vector<16x32xf32>
    %187 = vector.shape_cast %186 : vector<16x32xf32> to vector<2x8x32xf32>
    %c0_49 = arith.constant 0 : index
    %c0_50 = arith.constant 0 : index
    %c0_51 = arith.constant 0 : index
    %188 = vector.load %arg8[%c0_49, %c0_50, %c0_51] : memref<2x8x32xf32, #tpu.memory_space<vmem>>, vector<2x8x32xf32>
    tpu.vector_store %arg8[%c0_49, %c0_50, %c0_51], %187 {strides = array<i32>} : memref<2x8x32xf32, #tpu.memory_space<vmem>>, vector<2x8x32xf32>,
    return
  }
  func.func @transform_0(%arg0: i32, %arg1: i32) -> (i32, i32, i32) {
    %c0_i32 = arith.constant 0 : i32
    %c0_i32_0 = arith.constant 0 : i32
    %c0_i32_1 = arith.constant 0 : i32
    return %arg0, %c0_i32, %c0_i32_0 : i32, i32, i32
  }
  func.func @transform_1(%arg0: i32, %arg1: i32) -> (i32, i32, i32) {
    %c0_i32 = arith.constant 0 : i32
    %c0_i32_0 = arith.constant 0 : i32
    %c0_i32_1 = arith.constant 0 : i32
    return %arg1, %c0_i32, %c0_i32_0 : i32, i32, i32
  }
  func.func @transform_2(%arg0: i32, %arg1: i32) -> (i32, i32, i32) {
    %c0_i32 = arith.constant 0 : i32
    %c0_i32_0 = arith.constant 0 : i32
    %c0_i32_1 = arith.constant 0 : i32
    return %arg1, %c0_i32, %c0_i32_0 : i32, i32, i32
  }
  func.func @transform_3(%arg0: i32, %arg1: i32) -> (i32, i32, i32) {
    %c0_i32 = arith.constant 0 : i32
    %c0_i32_0 = arith.constant 0 : i32
    %c0_i32_1 = arith.constant 0 : i32
    return %arg1, %c0_i32, %c0_i32_0 : i32, i32, i32
  }
  func.func @transform_4(%arg0: i32, %arg1: i32) -> (i32, i32, i32) {
    %c0_i32 = arith.constant 0 : i32
    %c0_i32_0 = arith.constant 0 : i32
    %c0_i32_1 = arith.constant 0 : i32
    return %arg1, %c0_i32, %c0_i32_0 : i32, i32, i32
  }
  func.func @transform_5(%arg0: i32, %arg1: i32) -> (i32, i32, i32) {
    %c0_i32 = arith.constant 0 : i32
    %c0_i32_0 = arith.constant 0 : i32
    %c0_i32_1 = arith.constant 0 : i32
    return %arg1, %c0_i32, %c0_i32_0 : i32, i32, i32
  }
  func.func @transform_6(%arg0: i32, %arg1: i32) -> (i32, i32, i32) {
    %c0_i32 = arith.constant 0 : i32
    %c0_i32_0 = arith.constant 0 : i32
    %c0_i32_1 = arith.constant 0 : i32
    return %arg0, %c0_i32, %c0_i32_0 : i32, i32, i32
  }
}

</mosaic_0001>

<llo_original>
// kernel: tpu_custom_call.1
$region0: #{tpu_custom_call.1}
  #allocation0 [shape = 'u32[]', space=smem, size = 0x4, offset = 0x4, fixed_abs, tag = 'smem constant byte address 0x4 - core index']
  #allocation1 [shape = 'u32[144,128]{1,0:T(1,128)}', space=vmem, size = 0x12000, scoped, tag = 'internal scratch']
  %s0 = inlined_call_operand.hbm [shape: f32[2,8,32], index: 0, kind: input, shape index: {}, may-alias: {0,6}]
  %s1 = inlined_call_operand.hbm [shape: f32[2,8,64], index: 1, kind: input, shape index: {}]
  %s2 = inlined_call_operand.vmem [shape: bf16[2,32,96], index: 2, kind: input, shape index: {}]
  %s3 = inlined_call_operand.vmem [shape: bf16[2,32,32], index: 3, kind: input, shape index: {}]
  %s4 = inlined_call_operand.vmem [shape: bf16[2,32,64], index: 4, kind: input, shape index: {}]
  %s5 = inlined_call_operand.vmem [shape: bf16[2,64,32], index: 5, kind: input, shape index: {}]
  %s6 = inlined_call_operand.hbm [shape: f32[2,8,32], index: 6, kind: output, shape index: {}, may-alias: {0,6}]
  %s7 = sld [smem:[#allocation0]]
  $region69: #{tpu_custom_call.1} parent=0
    _
  %s9 = ssub.s32 1, %s7
  %s10 = scalar_select 0, %s9, %s7
  $region1: #{tpu_custom_call.1} parent=0
    #allocation2 [shape = 'u8[8192]{0}', space=vmem, size = 0x2000, scoped, tag = 'input window, operand 0, single buffered']
    #allocation3 [shape = 's32[2]{0}', space=sflag, size = 0x8, scoped, tag = 'scoped memory for tpu_custom_call.1']
    #allocation4 [shape = 's32[2]{0}', space=sflag, size = 0x8, scoped, tag = 'scoped memory for tpu_custom_call.1']
    #allocation5 [shape = 'u8[8192]{0}', space=vmem, size = 0x2000, scoped, tag = 'input window, operand 1']
    #allocation6 [shape = 's32[2]{0}', space=sflag, size = 0x8, scoped, tag = 'scoped memory for tpu_custom_call.1']
    #allocation7 [shape = 'u8[8192]{0}', space=vmem, size = 0x2000, scoped, tag = 'output window, operand 0, single buffered']
    %11 = vsyncpa [#allocation3], 0
    %12 = vsyncpa [#allocation6], 0
    %s13 = scalar_lea.sflag [#allocation6], 1
    %14 = vsyncpa %s13, 0
    %15 = vsyncpa [#allocation4], 0
    loop: start=0, step=1, limit=4
    $region2: #{tpu_custom_call.1} parent=1 // loop_pre_header
      _
    $region3: #{tpu_custom_call.1} parent=1 // loop_header
      %s17 = sphi 0, %s21
      %p18 = scmp.ge.s32.totalorder %s17, 4
      %s24 = sphi 0, %s36
      %s25 = sphi 0, %s32
      %s26 = sphi 0, %s24
      %s27 = sphi 0, %s25
      %s28 = sphi 0, %s26
      %s29 = sphi 0, %s27
      %s39 = sphi 0, %s41
      %s42 = sphi 0, %s39
      %s43 = sphi 0, %s42
      %s59 = sphi 0, %s43
      %s65 = sphi 0, %s67
      %s68 = sphi 0, %s65
      %s69 = sphi 0, %s68
      %s85 = sphi 0, %s69
      %s91 = sphi 0, %s93
      %s94 = sphi 0, %s91
      %s95 = sphi 0, %s94
      %s111 = sphi 0, %s95
      %s117 = sphi 0, %s119
      %s120 = sphi 0, %s117
      %s121 = sphi 0, %s120
      %s137 = sphi 0, %s121
      %s143 = sphi 0, %s145
      %s146 = sphi 0, %s143
      %s147 = sphi 0, %s146
      %s163 = sphi 0, %s147
      %s169 = sphi 0, %s171
      %s172 = sphi 0, %s169
      %s173 = sphi 0, %s172
      %s189 = sphi 0, %s173
      %s195 = sphi 0, %s197
      %s198 = sphi 0, %s195
      %s199 = sphi 0, %s198
      %s215 = sphi 0, %s199
    $region4: #{tpu_custom_call.1} parent=1 // loop_header_branch
      %20 = sbr.rel (%p18) target = $region8
    $region5: #{tpu_custom_call.1} parent=1 // loop_body
      %s22 = ssub.s32 %s17, 1
      %s23 = ssub.s32 %s17, 2
      %s30 = sadd.s32 1, %s25
      %p31 = scmp.ge.s32.totalorder %s30, 2
      %s32 = scalar_select %p31, 0, %s30
      %s33 = sadd.s32 1, %s24
      %s34 = scalar_select %p31, %s33, %s24
      %p35 = scmp.ge.s32.totalorder %s34, 1
      %s36 = scalar_select %p35, 0, %s34
      %s37 = ssub.s32 %s24, %s36
      %p38 = scmp.eq.s32.totalorder %s37, 0
      %s40 = sadd.s32 %s39, 1
      %s41 = scalar_select %p38, %s39, %s40
      %p44 = pneg %p38
      %p45 = scmp.eq.s32.totalorder %s17, 1
      %p46 = por %p44, %p45
      %p47 = scmp.ne.s32.totalorder %s39, %s42
      %p48 = scmp.eq.s32.totalorder %s17, 0
      %p49 = por %p47, %p48
      %p50 = scmp.ne.s32.totalorder %s39, %s42
      %p51 = scmp.eq.s32.totalorder %s22, 1
      %p52 = por %p50, %p51
      %p53 = scmp.ne.s32.totalorder %s42, %s43
      %p54 = scmp.eq.s32.totalorder %s22, 0
      %p55 = por %p53, %p54
      %p56 = scmp.ne.s32.totalorder %s42, %s43
      %p57 = scmp.eq.s32.totalorder %s23, 1
      %p58 = por %p56, %p57
      %p60 = scmp.ne.s32.totalorder %s43, %s59
      %p61 = scmp.eq.s32.totalorder %s23, 0
      %p62 = por %p60, %p61
      %s63 = ssub.s32 %s25, %s32
      %p64 = scmp.eq.s32.totalorder %s63, 0
      %s66 = sadd.s32 %s65, 1
      %s67 = scalar_select %p64, %s65, %s66
      %p70 = pneg %p64
      %p71 = scmp.eq.s32.totalorder %s17, 1
      %p72 = por %p70, %p71
      %p73 = scmp.ne.s32.totalorder %s65, %s68
      %p74 = scmp.eq.s32.totalorder %s17, 0
      %p75 = por %p73, %p74
      %p76 = scmp.ne.s32.totalorder %s65, %s68
      %p77 = scmp.eq.s32.totalorder %s22, 1
      %p78 = por %p76, %p77
      %p79 = scmp.ne.s32.totalorder %s68, %s69
      %p80 = scmp.eq.s32.totalorder %s22, 0
      %p81 = por %p79, %p80
      %p82 = scmp.ne.s32.totalorder %s68, %s69
      %p83 = scmp.eq.s32.totalorder %s23, 1
      %p84 = por %p82, %p83
      %p86 = scmp.ne.s32.totalorder %s69, %s85
      %p87 = scmp.eq.s32.totalorder %s23, 0
      %p88 = por %p86, %p87
      %s89 = ssub.s32 %s25, %s32
      %p90 = scmp.eq.s32.totalorder %s89, 0
      %s92 = sadd.s32 %s91, 1
      %s93 = scalar_select %p90, %s91, %s92
      %p96 = pneg %p90
      %p97 = scmp.eq.s32.totalorder %s17, 1
      %p98 = por %p96, %p97
      %p99 = scmp.ne.s32.totalorder %s91, %s94
      %p100 = scmp.eq.s32.totalorder %s17, 0
      %p101 = por %p99, %p100
      %p102 = scmp.ne.s32.totalorder %s91, %s94
      %p103 = scmp.eq.s32.totalorder %s22, 1
      %p104 = por %p102, %p103
      %p105 = scmp.ne.s32.totalorder %s94, %s95
      %p106 = scmp.eq.s32.totalorder %s22, 0
      %p107 = por %p105, %p106
      %p108 = scmp.ne.s32.totalorder %s94, %s95
      %p109 = scmp.eq.s32.totalorder %s23, 1
      %p110 = por %p108, %p109
      %p112 = scmp.ne.s32.totalorder %s95, %s111
      %p113 = scmp.eq.s32.totalorder %s23, 0
      %p114 = por %p112, %p113
      %s115 = ssub.s32 %s25, %s32
      %p116 = scmp.eq.s32.totalorder %s115, 0
      %s118 = sadd.s32 %s117, 1
      %s119 = scalar_select %p116, %s117, %s118
      %p122 = pneg %p116
      %p123 = scmp.eq.s32.totalorder %s17, 1
      %p124 = por %p122, %p123
      %p125 = scmp.ne.s32.totalorder %s117, %s120
      %p126 = scmp.eq.s32.totalorder %s17, 0
      %p127 = por %p125, %p126
      %p128 = scmp.ne.s32.totalorder %s117, %s120
      %p129 = scmp.eq.s32.totalorder %s22, 1
      %p130 = por %p128, %p129
      %p131 = scmp.ne.s32.totalorder %s120, %s121
      %p132 = scmp.eq.s32.totalorder %s22, 0
      %p133 = por %p131, %p132
      %p134 = scmp.ne.s32.totalorder %s120, %s121
      %p135 = scmp.eq.s32.totalorder %s23, 1
      %p136 = por %p134, %p135
      %p138 = scmp.ne.s32.totalorder %s121, %s137
      %p139 = scmp.eq.s32.totalorder %s23, 0
      %p140 = por %p138, %p139
      %s141 = ssub.s32 %s25, %s32
      %p142 = scmp.eq.s32.totalorder %s141, 0
      %s144 = sadd.s32 %s143, 1
      %s145 = scalar_select %p142, %s143, %s144
      %p148 = pneg %p142
      %p149 = scmp.eq.s32.totalorder %s17, 1
      %p150 = por %p148, %p149
      %p151 = scmp.ne.s32.totalorder %s143, %s146
      %p152 = scmp.eq.s32.totalorder %s17, 0
      %p153 = por %p151, %p152
      %p154 = scmp.ne.s32.totalorder %s143, %s146
      %p155 = scmp.eq.s32.totalorder %s22, 1
      %p156 = por %p154, %p155
      %p157 = scmp.ne.s32.totalorder %s146, %s147
      %p158 = scmp.eq.s32.totalorder %s22, 0
      %p159 = por %p157, %p158
      %p160 = scmp.ne.s32.totalorder %s146, %s147
      %p161 = scmp.eq.s32.totalorder %s23, 1
      %p162 = por %p160, %p161
      %p164 = scmp.ne.s32.totalorder %s147, %s163
      %p165 = scmp.eq.s32.totalorder %s23, 0
      %p166 = por %p164, %p165
      %s167 = ssub.s32 %s25, %s32
      %p168 = scmp.eq.s32.totalorder %s167, 0
      %s170 = sadd.s32 %s169, 1
      %s171 = scalar_select %p168, %s169, %s170
      %p174 = pneg %p168
      %p175 = scmp.eq.s32.totalorder %s17, 1
      %p176 = por %p174, %p175
      %p177 = scmp.ne.s32.totalorder %s169, %s172
      %p178 = scmp.eq.s32.totalorder %s17, 0
      %p179 = por %p177, %p178
      %p180 = scmp.ne.s32.totalorder %s169, %s172
      %p181 = scmp.eq.s32.totalorder %s22, 1
      %p182 = por %p180, %p181
      %p183 = scmp.ne.s32.totalorder %s172, %s173
      %p184 = scmp.eq.s32.totalorder %s22, 0
      %p185 = por %p183, %p184
      %p186 = scmp.ne.s32.totalorder %s172, %s173
      %p187 = scmp.eq.s32.totalorder %s23, 1
      %p188 = por %p186, %p187
      %p190 = scmp.ne.s32.totalorder %s173, %s189
      %p191 = scmp.eq.s32.totalorder %s23, 0
      %p192 = por %p190, %p191
      %s193 = ssub.s32 %s24, %s36
      %p194 = scmp.eq.s32.totalorder %s193, 0
      %s196 = sadd.s32 %s195, 1
      %s197 = scalar_select %p194, %s195, %s196
      %p200 = pneg %p194
      %p201 = scmp.eq.s32.totalorder %s17, 1
      %p202 = por %p200, %p201
      %p203 = scmp.ne.s32.totalorder %s195, %s198
      %p204 = scmp.eq.s32.totalorder %s17, 0
      %p205 = por %p203, %p204
      %p206 = scmp.ne.s32.totalorder %s195, %s198
      %p207 = scmp.eq.s32.totalorder %s22, 1
      %p208 = por %p206, %p207
      %p209 = scmp.ne.s32.totalorder %s198, %s199
      %p210 = scmp.eq.s32.totalorder %s22, 0
      %p211 = por %p209, %p210
      %p212 = scmp.ne.s32.totalorder %s198, %s199
      %p213 = scmp.eq.s32.totalorder %s23, 1
      %p214 = por %p212, %p213
      %p216 = scmp.ne.s32.totalorder %s199, %s215
      %p217 = scmp.eq.s32.totalorder %s23, 0
      %p218 = por %p216, %p217
      %p219 = scmp.le.s32.totalorder 1, %s17
      %p220 = scmp.lt.s32.totalorder %s17, 3
      %p221 = pnand %p219, %p220
      %p222 = pneg %p221
      // Predicated region
      $region9: #{tpu_custom_call.1} parent=5 // pred_check
        _
      $region10: #{tpu_custom_call.1} parent=5 // pred_check_branch
        %224 = sbr.rel (%p221) target = $region12
      $region11: #{tpu_custom_call.1} parent=5 // pred_region
        %s225 = ssub.s32 %s17, 1
        // Predicated region
        $region13: #{tpu_custom_call.1} parent=11 // pred_check
          %p226 = pneg %p55
        $region14: #{tpu_custom_call.1} parent=11 // pred_check_branch
          %228 = sbr.rel (%p226) target = $region16
        $region15: #{tpu_custom_call.1} parent=11 // pred_region
          %s229 = smul.u32 2, %s26
          %s231 = ssub.s32 256, 256
          %232 = vsyncadd [#allocation3], %s231
          %s233 = smul.addr %s229, 128
          %s234 = scalar_lea.hbm %s0, %s233
          %s235 = sshll.u32 [#allocation2], 4
          %s236 = int_to_ptr.vmem [resolvable:$true] %s235
          %241 = dma.hbm_to_vmem [thread:$0]  %s234, 256, %s236, [#allocation3], 128, 128, 8
        $region16: #{tpu_custom_call.1} parent=11 // pred_fallthru
          _
      $region12: #{tpu_custom_call.1} parent=5 // pred_fallthru
        _
      %p242 = scmp.lt.s32.totalorder %s17, 2
      // Predicated region
      $region17: #{tpu_custom_call.1} parent=5 // pred_check
        %p243 = pneg %p242
      $region18: #{tpu_custom_call.1} parent=5 // pred_check_branch
        %245 = sbr.rel (%p243) target = $region20
      $region19: #{tpu_custom_call.1} parent=5 // pred_region
        // Predicated region
        $region21: #{tpu_custom_call.1} parent=19 // pred_check
          %p246 = pneg %p75
        $region22: #{tpu_custom_call.1} parent=19 // pred_check_branch
          %248 = sbr.rel (%p246) target = $region24
        $region23: #{tpu_custom_call.1} parent=19 // pred_region
          %s249 = sand.u32 %s65, 1
          %s250 = scalar_lea.sflag [#allocation6], %s249
          %s251 = sand.u32 %s65, 1
          %s252 = smul.addr %s251, 8
          %s253 = scalar_lea.vmem [#allocation5], %s252
          %s255 = ssub.s32 128, 128
          %256 = vsyncadd %s250, %s255
          %s257 = smul.addr %s25, 128
          %s258 = scalar_lea.hbm %s1, %s257
          %s260 = sshll.u32 %s253, 4
          %s261 = int_to_ptr.vmem [resolvable:$true] %s260
          %263 = dma.hbm_to_vmem [thread:$0]  %s258, 128, %s261, %s250
        $region24: #{tpu_custom_call.1} parent=19 // pred_fallthru
          _
        // Predicated region
        $region25: #{tpu_custom_call.1} parent=19 // pred_check
          %p264 = pneg %p101
        $region26: #{tpu_custom_call.1} parent=19 // pred_check_branch
          %266 = sbr.rel (%p264) target = $region28
        $region27: #{tpu_custom_call.1} parent=19 // pred_region
          %p267 = scmp.lt.s32.totalorder %s25, 1
          %s268 = scalar_select %p267, %s25, 1
          %s269 = smul.addr %s268, 4
          %s270 = smul.addr %s269, 4
          %s271 = scalar_lea.vmem %s2, %s270
        $region28: #{tpu_custom_call.1} parent=19 // pred_fallthru
          _
        // Predicated region
        $region29: #{tpu_custom_call.1} parent=19 // pred_check
          %p272 = pneg %p127
        $region30: #{tpu_custom_call.1} parent=19 // pred_check_branch
          %274 = sbr.rel (%p272) target = $region32
        $region31: #{tpu_custom_call.1} parent=19 // pred_region
          %p275 = scmp.lt.s32.totalorder %s25, 1
          %s276 = scalar_select %p275, %s25, 1
          %s277 = smul.addr %s276, 4
          %s278 = smul.addr %s277, 4
          %s279 = scalar_lea.vmem %s3, %s278
        $region32: #{tpu_custom_call.1} parent=19 // pred_fallthru
          _
        // Predicated region
        $region33: #{tpu_custom_call.1} parent=19 // pred_check
          %p280 = pneg %p153
        $region34: #{tpu_custom_call.1} parent=19 // pred_check_branch
          %282 = sbr.rel (%p280) target = $region36
        $region35: #{tpu_custom_call.1} parent=19 // pred_region
          %p283 = scmp.lt.s32.totalorder %s25, 1
          %s284 = scalar_select %p283, %s25, 1
          %s285 = smul.addr %s284, 4
          %s286 = smul.addr %s285, 4
          %s287 = scalar_lea.vmem %s4, %s286
        $region36: #{tpu_custom_call.1} parent=19 // pred_fallthru
          _
        // Predicated region
        $region37: #{tpu_custom_call.1} parent=19 // pred_check
          %p288 = pneg %p179
        $region38: #{tpu_custom_call.1} parent=19 // pred_check_branch
          %290 = sbr.rel (%p288) target = $region40
        $region39: #{tpu_custom_call.1} parent=19 // pred_region
          %p291 = scmp.lt.s32.totalorder %s25, 1
          %s292 = scalar_select %p291, %s25, 1
          %s293 = smul.addr %s292, 8
          %s294 = smul.addr %s293, 4
          %s295 = scalar_lea.vmem %s5, %s294
        $region40: #{tpu_custom_call.1} parent=19 // pred_fallthru
          _
      $region20: #{tpu_custom_call.1} parent=5 // pred_fallthru
        _
      %p296 = scmp.le.s32.totalorder 1, %s17
      %p297 = scmp.lt.s32.totalorder %s17, 3
      %p298 = pnand %p296, %p297
      %p299 = pneg %p298
      // Predicated region
      $region41: #{tpu_custom_call.1} parent=5 // pred_check
        _
      $region42: #{tpu_custom_call.1} parent=5 // pred_check_branch
        %301 = sbr.rel (%p298) target = $region44
      $region43: #{tpu_custom_call.1} parent=5 // pred_region
        %s302 = ssub.s32 %s17, 1
        // Predicated region
        $region45: #{tpu_custom_call.1} parent=43 // pred_check
          %p303 = pneg %p55
        $region46: #{tpu_custom_call.1} parent=43 // pred_check_branch
          %305 = sbr.rel (%p303) target = $region48
        $region47: #{tpu_custom_call.1} parent=43 // pred_region
          %306 = dma.done [#allocation3], 256
        $region48: #{tpu_custom_call.1} parent=43 // pred_fallthru
          _
        %s307 = sand.u32 %s68, 1
        %s308 = scalar_lea.sflag [#allocation6], %s307
        %s309 = sand.u32 %s68, 1
        %s310 = smul.addr %s309, 8
        %s311 = scalar_lea.vmem [#allocation5], %s310
        // Predicated region
        $region49: #{tpu_custom_call.1} parent=43 // pred_check
          %p312 = pneg %p81
        $region50: #{tpu_custom_call.1} parent=43 // pred_check_branch
          %314 = sbr.rel (%p312) target = $region52
        $region51: #{tpu_custom_call.1} parent=43 // pred_region
          %315 = dma.done %s308, 128
        $region52: #{tpu_custom_call.1} parent=43 // pred_fallthru
          _
        %p316 = pneg %p55
        %p317 = pneg %p52
        %s318 = sand.u32 %s68, 1
        %s319 = scalar_lea.sflag [#allocation6], %s318
        %s320 = sand.u32 %s68, 1
        %s321 = smul.addr %s320, 8
        %s322 = scalar_lea.vmem [#allocation5], %s321
        %p323 = pneg %p81
        %p324 = pneg %p78
        %p325 = scmp.lt.s32.totalorder %s27, 1
        %s326 = scalar_select %p325, %s27, 1
        %s327 = smul.addr %s326, 4
        %s328 = smul.addr %s327, 4
        %s329 = scalar_lea.vmem %s2, %s328
        %p330 = pneg %p107
        %p331 = pneg %p104
        %p332 = scmp.lt.s32.totalorder %s27, 1
        %s333 = scalar_select %p332, %s27, 1
        %s334 = smul.addr %s333, 4
        %s335 = smul.addr %s334, 4
        %s336 = scalar_lea.vmem %s3, %s335
        %p337 = pneg %p133
        %p338 = pneg %p130
        %p339 = scmp.lt.s32.totalorder %s27, 1
        %s340 = scalar_select %p339, %s27, 1
        %s341 = smul.addr %s340, 4
        %s342 = smul.addr %s341, 4
        %s343 = scalar_lea.vmem %s4, %s342
        %p344 = pneg %p159
        %p345 = pneg %p156
        %p346 = scmp.lt.s32.totalorder %s27, 1
        %s347 = scalar_select %p346, %s27, 1
        %s348 = smul.addr %s347, 8
        %s349 = smul.addr %s348, 4
        %s350 = scalar_lea.vmem %s5, %s349
        %p351 = pneg %p185
        %p352 = pneg %p182
        %p353 = pneg %p211
        %p354 = pneg %p208
        %s355 = smul.u32 2, %s26
        %p356 = scmp.lt.s32.totalorder %s27, 1
        %s357 = scalar_select %p356, %s27, 1
        %s358 = smul.addr %s357, 4
        %s359 = smul.addr %s358, 4
        %s360 = scalar_lea.vmem %s2, %s359
        %p361 = scmp.lt.s32.totalorder %s27, 1
        %s362 = scalar_select %p361, %s27, 1
        %s363 = smul.addr %s362, 4
        %s364 = smul.addr %s363, 4
        %s365 = scalar_lea.vmem %s3, %s364
        %p366 = scmp.lt.s32.totalorder %s27, 1
        %s367 = scalar_select %p366, %s27, 1
        %s368 = smul.addr %s367, 4
        %s369 = smul.addr %s368, 4
        %s370 = scalar_lea.vmem %s4, %s369
        %p371 = scmp.lt.s32.totalorder %s27, 1
        %s372 = scalar_select %p371, %s27, 1
        %s373 = smul.addr %s372, 8
        %s374 = smul.addr %s373, 4
        %s375 = scalar_lea.vmem %s5, %s374
        %s376 = smul.u32 2, %s26
        %p378 = scmp.eq.s32.totalorder %s27, 0
        // Predicated region
        $region53: #{tpu_custom_call.1} parent=43 // pred_check
          %p379 = pneg %p378
        $region54: #{tpu_custom_call.1} parent=43 // pred_check_branch
          %381 = sbr.rel (%p379) target = $region56
        $region55: #{tpu_custom_call.1} parent=43 // pred_region
          %v382 = vld [vmem:[#allocation2] sm:$0xff]
          %v383 = vld [vmem:[#allocation2 + $0x8] sm:$0xff]
          %vm384 = vcmask 261120
          %385 = vst.msk [vmem:[#allocation7] sm:$0xff] %vm384, %v382
          %386 = vst.msk [vmem:[#allocation7 + $0x8] sm:$0xff] %vm384, %v383
        $region56: #{tpu_custom_call.1} parent=43 // pred_fallthru
          _
        %v387 = vld [vmem:[%s311] sm:$0xff]
        %v388 = vld [vmem:[#allocation7] sm:$0xff]
        %v389 = vld [vmem:[#allocation7 + $0x8] sm:$0xff]
        %vm390 = vcmask 261120
        %v391 = vsel %vm390, %v388, 0.0
        %392 = vadd.xlane.f32.xlu0 %v391
        %v393 = vpop.xlane.xlu0 %392
        %v394 = vsel %vm390, %v389, 0.0
        %395 = vadd.xlane.f32.xlu0 %v394
        %v396 = vpop.xlane.xlu0 %395
        %v397 = vrcp.pop 32.0
        %v398 = vmul.f32 %v393, %v397
        %v399 = vmul.f32 %v396, %v397
        %v400 = vsub.f32 %v388, %v398
        %v401 = vsub.f32 %v389, %v399
        %v402 = vmul.f32 %v400, %v400
        %v403 = vmul.f32 %v401, %v401
        %v404 = vsel %vm390, %v402, 0.0
        %405 = vadd.xlane.f32.xlu0 %v404
        %v406 = vpop.xlane.xlu0 %405
        %v407 = vsel %vm390, %v403, 0.0
        %408 = vadd.xlane.f32.xlu0 %v407
        %v409 = vpop.xlane.xlu0 %408
        %v410 = vmul.f32 %v406, %v397
        %v411 = vmul.f32 %v409, %v397
        %v412 = vadd.f32 %v410, 1e-05
        %v413 = vadd.f32 %v411, 1e-05
        %v414 = vrsqrt.pop %v412
        %v415 = vrsqrt.pop %v413
        %v416 = vmul.f32 %v400, %v414
        %v417 = vmul.f32 %v401, %v415
        %v418 = vlaneseq
        %v419 = vshrl.u32 %v418, 7
        %v420 = vsub.s32 0, %v419
        %v421 = vrot.slane %v387, %v420
        %v422 = vmul.f32 %v416, %v421
        %v423 = vmul.f32 %v417, %v421
        %v424 = vlaneseq
        %v425 = vshrl.u32 %v424, 7
        %v426 = vsub.s32 1, %v425
        %v427 = vrot.slane %v387, %v426
        %v428 = vadd.f32 %v422, %v427
        %v429 = vadd.f32 %v423, %v427
        %v430 = vpack.c.bf16 %v429, %v428
        %v431 = vld [vmem:[%s360] sm:$0xf]
        %v432 = vld [vmem:[%s360 + $0x4] sm:$0xf]
        %v433 = vld [vmem:[%s360 + $0x8] sm:$0xf]
        %v434 = vld [vmem:[%s360 + $0xc] sm:$0xf]
        %v439 = vunpack.c.l.b16 %v431
        %v440 = vunpack.c.l.b16 %v432
        %v441 = vunpack.c.l.b16 %v433
        %v442 = vunpack.c.l.b16 %v434
        %v443 = vpack.c.b16 %v440, %v439
        %v444 = vpack.c.b16 %v442, %v441
        %v448 = vsel %vm390, %v430, 0
        %450 = vmatprep.subr.bf16.mxu0 0
        %451 = vmatpush1.bf16.msra.mxu0 0
        %452 = vmatprep.subr.bf16.mxu0 0
        %453 = vmatpush1.bf16.msra.mxu0 0
        %454 = vmatprep.subr.bf16.mxu0 0
        %455 = vmatpush1.bf16.msra.mxu0 0
        %456 = vmatprep.subr.bf16.mxu0 0
        %457 = vmatpush1.bf16.msra.mxu0 0
        %458 = vmatprep.subr.bf16.mxu0 0
        %459 = vmatpush1.bf16.msra.mxu0 0
        %460 = vmatprep.subr.bf16.mxu0 0
        %461 = vmatpush1.bf16.msra.mxu0 0
        %462 = vmatprep.subr.bf16.mxu0 0
        %463 = vmatpush1.bf16.msra.mxu0 %v444
        %464 = vmatprep.subr.bf16.mxu0 0
        %465 = vmatpush1.bf16.msra.mxu0 %v443
        %466 = vmatprep.subr.bf16.mxu0 0
        %467 = vmatpush2.bf16.msra.mxu0 0
        %468 = vmatprep.subr.bf16.mxu0 0
        %469 = vmatpush2.bf16.msra.mxu0 0
        %470 = vmatprep.subr.bf16.mxu0 0
        %471 = vmatpush2.bf16.msra.mxu0 0
        %472 = vmatprep.subr.bf16.mxu0 0
        %473 = vmatpush2.bf16.msra.mxu0 0
        %474 = vmatprep.subr.bf16.mxu0 0
        %475 = vmatpush2.bf16.msra.mxu0 0
        %476 = vmatprep.subr.bf16.mxu0 0
        %477 = vmatpush2.bf16.msra.mxu0 0
        %478 = vmatprep.subr.bf16.mxu0 0
        %479 = vmatpush2.bf16.msra.mxu0 0
        %480 = vmatprep.subr.bf16.mxu0 0
        %481 = vmatpush2.bf16.msra.mxu0 0
        %482 = vmatprep.mubr.bf16.mxu0 0
        %483 = vmatmul.mubr.bf16.gmra.mxu0 %v448
        %v484 = vpop.f32.mrf.mxu0
        %v485 = vadd.f32 0.0, %v484
        %v486 = vpop.f32.mrf.mxu0
        %v487 = vpop.f32.mrf.mxu0
        %v488 = vadd.f32 0.0, %v487
        %v489 = vpop.f32.mrf.mxu0
        %490 = vdwg.mxu0
        %v491 = vmul.f32 %v485, 0.35355338
        %v492 = vmul.f32 %v488, 0.35355338
        %v493 = vpack.c.bf16 %v492, %v491
        %v494 = vpack.c.bf16 %v488, %v485
        %v496 = vunpack.c.l.b16 %v493
        %v497 = vunpack.c.h.b16 %v493
        %v498 = vpack.c.b16 %v496, %v496
        %v499 = vpack.c.b16 %v497, %v497
        %v501 = vunpack.c.l.b16 %v494
        %v502 = vunpack.c.h.b16 %v494
        %v503 = vpack.c.b16 %v501, %v501
        %504 = vrot.lane.b32.xlu0 %v503, 96
        %v505 = vpop.permute.xlu0 %504
        %vm506 = vcmask 64512
        %v508 = vsel %vm506, %v498, 0
        %v511 = vsel %vm506, %v505, 0
        %513 = vmatprep.subr.bf16.mxu0 0
        %514 = vmatpush1.bf16.xpose.msra.mxu0 0
        %515 = vmatprep.subr.bf16.mxu0 0
        %516 = vmatpush1.bf16.xpose.msra.mxu0 0
        %517 = vmatprep.subr.bf16.mxu0 0
        %518 = vmatpush1.bf16.xpose.msra.mxu0 0
        %519 = vmatprep.subr.bf16.mxu0 0
        %520 = vmatpush1.bf16.xpose.msra.mxu0 0
        %521 = vmatprep.subr.bf16.mxu0 0
        %522 = vmatpush1.bf16.xpose.msra.mxu0 0
        %523 = vmatprep.subr.bf16.mxu0 0
        %524 = vmatpush1.bf16.xpose.msra.mxu0 0
        %525 = vmatprep.subr.bf16.mxu0 0
        %526 = vmatpush1.bf16.xpose.msra.mxu0 0
        %527 = vmatprep.subr.bf16.mxu0 0
        %528 = vmatpush1.bf16.xpose.msra.mxu0 %v511
        %529 = vmatprep.subr.bf16.mxu0 0
        %530 = vmatpush2.bf16.xpose.msra.mxu0 0
        %531 = vmatprep.subr.bf16.mxu0 0
        %532 = vmatpush2.bf16.xpose.msra.mxu0 0
        %533 = vmatprep.subr.bf16.mxu0 0
        %534 = vmatpush2.bf16.xpose.msra.mxu0 0
        %535 = vmatprep.subr.bf16.mxu0 0
        %536 = vmatpush2.bf16.xpose.msra.mxu0 0
        %537 = vmatprep.subr.bf16.mxu0 0
        %538 = vmatpush2.bf16.xpose.msra.mxu0 0
        %539 = vmatprep.subr.bf16.mxu0 0
        %540 = vmatpush2.bf16.xpose.msra.mxu0 0
        %541 = vmatprep.subr.bf16.mxu0 0
        %542 = vmatpush2.bf16.xpose.msra.mxu0 0
        %543 = vmatprep.subr.bf16.mxu0 0
        %544 = vmatpush2.bf16.xpose.msra.mxu0 0
        %545 = vmatprep.mubr.bf16.mxu0 0
        %546 = vmatmul.mubr.bf16.gmra.mxu0 %v508
        %v547 = vpop.f32.mrf.mxu0
        %v548 = vadd.f32 0.0, %v547
        %v549 = vpop.f32.mrf.mxu0
        %v550 = vpop.f32.mrf.mxu0
        %v551 = vpop.f32.mrf.mxu0
        %552 = vdwg.mxu0
        %v553 = vpack.c.b16 %v502, %v502
        %554 = vrot.lane.b32.xlu0 %v553, 96
        %v555 = vpop.permute.xlu0 %554
        %v557 = vsel %vm506, %v499, 0
        %v560 = vsel %vm506, %v555, 0
        %562 = vmatprep.subr.bf16.mxu0 0
        %563 = vmatpush1.bf16.xpose.msra.mxu0 0
        %564 = vmatprep.subr.bf16.mxu0 0
        %565 = vmatpush1.bf16.xpose.msra.mxu0 0
        %566 = vmatprep.subr.bf16.mxu0 0
        %567 = vmatpush1.bf16.xpose.msra.mxu0 0
        %568 = vmatprep.subr.bf16.mxu0 0
        %569 = vmatpush1.bf16.xpose.msra.mxu0 0
        %570 = vmatprep.subr.bf16.mxu0 0
        %571 = vmatpush1.bf16.xpose.msra.mxu0 0
        %572 = vmatprep.subr.bf16.mxu0 0
        %573 = vmatpush1.bf16.xpose.msra.mxu0 0
        %574 = vmatprep.subr.bf16.mxu0 0
        %575 = vmatpush1.bf16.xpose.msra.mxu0 0
        %576 = vmatprep.subr.bf16.mxu0 0
        %577 = vmatpush1.bf16.xpose.msra.mxu0 %v560
        %578 = vmatprep.subr.bf16.mxu0 0
        %579 = vmatpush2.bf16.xpose.msra.mxu0 0
        %580 = vmatprep.subr.bf16.mxu0 0
        %581 = vmatpush2.bf16.xpose.msra.mxu0 0
        %582 = vmatprep.subr.bf16.mxu0 0
        %583 = vmatpush2.bf16.xpose.msra.mxu0 0
        %584 = vmatprep.subr.bf16.mxu0 0
        %585 = vmatpush2.bf16.xpose.msra.mxu0 0
        %586 = vmatprep.subr.bf16.mxu0 0
        %587 = vmatpush2.bf16.xpose.msra.mxu0 0
        %588 = vmatprep.subr.bf16.mxu0 0
        %589 = vmatpush2.bf16.xpose.msra.mxu0 0
        %590 = vmatprep.subr.bf16.mxu0 0
        %591 = vmatpush2.bf16.xpose.msra.mxu0 0
        %592 = vmatprep.subr.bf16.mxu0 0
        %593 = vmatpush2.bf16.xpose.msra.mxu0 0
        %594 = vmatprep.mubr.bf16.mxu0 0
        %595 = vmatmul.mubr.bf16.gmra.mxu0 %v557
        %v596 = vpop.f32.mrf.mxu0
        %v597 = vadd.f32 0.0, %v596
        %v598 = vpop.f32.mrf.mxu0
        %v599 = vpop.f32.mrf.mxu0
        %v600 = vpop.f32.mrf.mxu0
        %601 = vdwg.mxu0
        %v602 = vsel %vm506, %v548, -inf
        %603 = vmax.xlane.f32.xlu0 %v602
        %v604 = vpop.xlane.xlu0 %603
        %v605 = vsel %vm506, %v597, -inf
        %606 = vmax.xlane.f32.xlu0 %v605
        %v607 = vpop.xlane.xlu0 %606
        %v608 = vsub.f32 %v548, %v604
        %v609 = vsub.f32 %v597, %v607
        %v610 = vmul.f32 %v608, 1.442695
        %v611 = vpow.pop %v610
        %v612 = vmul.f32 %v609, 1.442695
        %v613 = vpow.pop %v612
        %v614 = vsel %vm506, %v611, 0.0
        %615 = vadd.xlane.f32.xlu0 %v614
        %v616 = vpop.xlane.xlu0 %615
        %v617 = vsel %vm506, %v613, 0.0
        %618 = vadd.xlane.f32.xlu0 %v617
        %v619 = vpop.xlane.xlu0 %618
        %v620 = vrcp.pop %v616
        %v621 = vrcp.pop %v619
        %v622 = vmul.f32 %v611, %v620
        %v623 = vmul.f32 %v613, %v621
        %v624 = vpack.c.bf16 %v622, %v622
        %v625 = vpack.c.bf16 %v623, %v623
        %626 = vrot.lane.b32.xlu0 %v503, 64
        %v627 = vpop.permute.xlu0 %626
        %v629 = vsel %vm506, %v624, 0
        %vm631 = vcmask 1043456
        %v633 = vsel %vm631, %v627, 0
        %635 = vmatprep.subr.bf16.mxu0 0
        %636 = vmatpush1.bf16.msra.mxu0 0
        %637 = vmatprep.subr.bf16.mxu0 0
        %638 = vmatpush1.bf16.msra.mxu0 0
        %639 = vmatprep.subr.bf16.mxu0 0
        %640 = vmatpush1.bf16.msra.mxu0 0
        %641 = vmatprep.subr.bf16.mxu0 0
        %642 = vmatpush1.bf16.msra.mxu0 0
        %643 = vmatprep.subr.bf16.mxu0 0
        %644 = vmatpush1.bf16.msra.mxu0 0
        %645 = vmatprep.subr.bf16.mxu0 0
        %646 = vmatpush1.bf16.msra.mxu0 0
        %647 = vmatprep.subr.bf16.mxu0 0
        %648 = vmatpush1.bf16.msra.mxu0 0
        %649 = vmatprep.subr.bf16.mxu0 0
        %650 = vmatpush1.bf16.msra.mxu0 %v633
        %651 = vmatprep.subr.bf16.mxu0 0
        %652 = vmatpush2.bf16.msra.mxu0 0
        %653 = vmatprep.subr.bf16.mxu0 0
        %654 = vmatpush2.bf16.msra.mxu0 0
        %655 = vmatprep.subr.bf16.mxu0 0
        %656 = vmatpush2.bf16.msra.mxu0 0
        %657 = vmatprep.subr.bf16.mxu0 0
        %658 = vmatpush2.bf16.msra.mxu0 0
        %659 = vmatprep.subr.bf16.mxu0 0
        %660 = vmatpush2.bf16.msra.mxu0 0
        %661 = vmatprep.subr.bf16.mxu0 0
        %662 = vmatpush2.bf16.msra.mxu0 0
        %663 = vmatprep.subr.bf16.mxu0 0
        %664 = vmatpush2.bf16.msra.mxu0 0
        %665 = vmatprep.subr.bf16.mxu0 0
        %666 = vmatpush2.bf16.msra.mxu0 0
        %667 = vmatprep.mubr.bf16.mxu0 0
        %668 = vmatmul.mubr.bf16.gmra.mxu0 %v629
        %v669 = vpop.f32.mrf.mxu0
        %v670 = vadd.f32 0.0, %v669
        %v671 = vpop.f32.mrf.mxu0
        %v672 = vpop.f32.mrf.mxu0
        %v673 = vpop.f32.mrf.mxu0
        %674 = vdwg.mxu0
        %675 = vrot.lane.b32.xlu0 %v553, 64
        %v676 = vpop.permute.xlu0 %675
        %v678 = vsel %vm506, %v625, 0
        %v681 = vsel %vm631, %v676, 0
        %683 = vmatprep.subr.bf16.mxu0 0
        %684 = vmatpush1.bf16.msra.mxu0 0
        %685 = vmatprep.subr.bf16.mxu0 0
        %686 = vmatpush1.bf16.msra.mxu0 0
        %687 = vmatprep.subr.bf16.mxu0 0
        %688 = vmatpush1.bf16.msra.mxu0 0
        %689 = vmatprep.subr.bf16.mxu0 0
        %690 = vmatpush1.bf16.msra.mxu0 0
        %691 = vmatprep.subr.bf16.mxu0 0
        %692 = vmatpush1.bf16.msra.mxu0 0
        %693 = vmatprep.subr.bf16.mxu0 0
        %694 = vmatpush1.bf16.msra.mxu0 0
        %695 = vmatprep.subr.bf16.mxu0 0
        %696 = vmatpush1.bf16.msra.mxu0 0
        %697 = vmatprep.subr.bf16.mxu0 0
        %698 = vmatpush1.bf16.msra.mxu0 %v681
        %699 = vmatprep.subr.bf16.mxu0 0
        %700 = vmatpush2.bf16.msra.mxu0 0
        %701 = vmatprep.subr.bf16.mxu0 0
        %702 = vmatpush2.bf16.msra.mxu0 0
        %703 = vmatprep.subr.bf16.mxu0 0
        %704 = vmatpush2.bf16.msra.mxu0 0
        %705 = vmatprep.subr.bf16.mxu0 0
        %706 = vmatpush2.bf16.msra.mxu0 0
        %707 = vmatprep.subr.bf16.mxu0 0
        %708 = vmatpush2.bf16.msra.mxu0 0
        %709 = vmatprep.subr.bf16.mxu0 0
        %710 = vmatpush2.bf16.msra.mxu0 0
        %711 = vmatprep.subr.bf16.mxu0 0
        %712 = vmatpush2.bf16.msra.mxu0 0
        %713 = vmatprep.subr.bf16.mxu0 0
        %714 = vmatpush2.bf16.msra.mxu0 0
        %715 = vmatprep.mubr.bf16.mxu0 0
        %716 = vmatmul.mubr.bf16.gmra.mxu0 %v678
        %v717 = vpop.f32.mrf.mxu0
        %v718 = vadd.f32 0.0, %v717
        %v719 = vpop.f32.mrf.mxu0
        %v720 = vpop.f32.mrf.mxu0
        %v721 = vpop.f32.mrf.mxu0
        %722 = vdwg.mxu0
        %723 = vrot.lane.b32.xlu0 %v498, 120
        %v724 = vpop.permute.xlu0 %723
        %725 = vrot.lane.b32.xlu0 %v503, 88
        %v726 = vpop.permute.xlu0 %725
        %v728 = vsel %vm506, %v724, 0
        %v731 = vsel %vm506, %v726, 0
        %733 = vmatprep.subr.bf16.mxu0 0
        %734 = vmatpush1.bf16.xpose.msra.mxu0 0
        %735 = vmatprep.subr.bf16.mxu0 0
        %736 = vmatpush1.bf16.xpose.msra.mxu0 0
        %737 = vmatprep.subr.bf16.mxu0 0
        %738 = vmatpush1.bf16.xpose.msra.mxu0 0
        %739 = vmatprep.subr.bf16.mxu0 0
        %740 = vmatpush1.bf16.xpose.msra.mxu0 0
        %741 = vmatprep.subr.bf16.mxu0 0
        %742 = vmatpush1.bf16.xpose.msra.mxu0 0
        %743 = vmatprep.subr.bf16.mxu0 0
        %744 = vmatpush1.bf16.xpose.msra.mxu0 0
        %745 = vmatprep.subr.bf16.mxu0 0
        %746 = vmatpush1.bf16.xpose.msra.mxu0 0
        %747 = vmatprep.subr.bf16.mxu0 0
        %748 = vmatpush1.bf16.xpose.msra.mxu0 %v731
        %749 = vmatprep.subr.bf16.mxu0 0
        %750 = vmatpush2.bf16.xpose.msra.mxu0 0
        %751 = vmatprep.subr.bf16.mxu0 0
        %752 = vmatpush2.bf16.xpose.msra.mxu0 0
        %753 = vmatprep.subr.bf16.mxu0 0
        %754 = vmatpush2.bf16.xpose.msra.mxu0 0
        %755 = vmatprep.subr.bf16.mxu0 0
        %756 = vmatpush2.bf16.xpose.msra.mxu0 0
        %757 = vmatprep.subr.bf16.mxu0 0
        %758 = vmatpush2.bf16.xpose.msra.mxu0 0
        %759 = vmatprep.subr.bf16.mxu0 0
        %760 = vmatpush2.bf16.xpose.msra.mxu0 0
        %761 = vmatprep.subr.bf16.mxu0 0
        %762 = vmatpush2.bf16.xpose.msra.mxu0 0
        %763 = vmatprep.subr.bf16.mxu0 0
        %764 = vmatpush2.bf16.xpose.msra.mxu0 0
        %765 = vmatprep.mubr.bf16.mxu0 0
        %766 = vmatmul.mubr.bf16.gmra.mxu0 %v728
        %v767 = vpop.f32.mrf.mxu0
        %v768 = vadd.f32 0.0, %v767
        %v769 = vpop.f32.mrf.mxu0
        %v770 = vpop.f32.mrf.mxu0
        %v771 = vpop.f32.mrf.mxu0
        %772 = vdwg.mxu0
        %773 = vrot.lane.b32.xlu0 %v499, 120
        %v774 = vpop.permute.xlu0 %773
        %775 = vrot.lane.b32.xlu0 %v553, 88
        %v776 = vpop.permute.xlu0 %775
        %v778 = vsel %vm506, %v774, 0
        %v781 = vsel %vm506, %v776, 0
        %783 = vmatprep.subr.bf16.mxu0 0
        %784 = vmatpush1.bf16.xpose.msra.mxu0 0
        %785 = vmatprep.subr.bf16.mxu0 0
        %786 = vmatpush1.bf16.xpose.msra.mxu0 0
        %787 = vmatprep.subr.bf16.mxu0 0
        %788 = vmatpush1.bf16.xpose.msra.mxu0 0
        %789 = vmatprep.subr.bf16.mxu0 0
        %790 = vmatpush1.bf16.xpose.msra.mxu0 0
        %791 = vmatprep.subr.bf16.mxu0 0
        %792 = vmatpush1.bf16.xpose.msra.mxu0 0
        %793 = vmatprep.subr.bf16.mxu0 0
        %794 = vmatpush1.bf16.xpose.msra.mxu0 0
        %795 = vmatprep.subr.bf16.mxu0 0
        %796 = vmatpush1.bf16.xpose.msra.mxu0 0
        %797 = vmatprep.subr.bf16.mxu0 0
        %798 = vmatpush1.bf16.xpose.msra.mxu0 %v781
        %799 = vmatprep.subr.bf16.mxu0 0
        %800 = vmatpush2.bf16.xpose.msra.mxu0 0
        %801 = vmatprep.subr.bf16.mxu0 0
        %802 = vmatpush2.bf16.xpose.msra.mxu0 0
        %803 = vmatprep.subr.bf16.mxu0 0
        %804 = vmatpush2.bf16.xpose.msra.mxu0 0
        %805 = vmatprep.subr.bf16.mxu0 0
        %806 = vmatpush2.bf16.xpose.msra.mxu0 0
        %807 = vmatprep.subr.bf16.mxu0 0
        %808 = vmatpush2.bf16.xpose.msra.mxu0 0
        %809 = vmatprep.subr.bf16.mxu0 0
        %810 = vmatpush2.bf16.xpose.msra.mxu0 0
        %811 = vmatprep.subr.bf16.mxu0 0
        %812 = vmatpush2.bf16.xpose.msra.mxu0 0
        %813 = vmatprep.subr.bf16.mxu0 0
        %814 = vmatpush2.bf16.xpose.msra.mxu0 0
        %815 = vmatprep.mubr.bf16.mxu0 0
        %816 = vmatmul.mubr.bf16.gmra.mxu0 %v778
        %v817 = vpop.f32.mrf.mxu0
        %v818 = vadd.f32 0.0, %v817
        %v819 = vpop.f32.mrf.mxu0
        %v820 = vpop.f32.mrf.mxu0
        %v821 = vpop.f32.mrf.mxu0
        %822 = vdwg.mxu0
        %v823 = vsel %vm506, %v768, -inf
        %824 = vmax.xlane.f32.xlu0 %v823
        %v825 = vpop.xlane.xlu0 %824
        %v826 = vsel %vm506, %v818, -inf
        %827 = vmax.xlane.f32.xlu0 %v826
        %v828 = vpop.xlane.xlu0 %827
        %v829 = vsub.f32 %v768, %v825
        %v830 = vsub.f32 %v818, %v828
        %v831 = vmul.f32 %v829, 1.442695
        %v832 = vpow.pop %v831
        %v833 = vmul.f32 %v830, 1.442695
        %v834 = vpow.pop %v833
        %v835 = vsel %vm506, %v832, 0.0
        %836 = vadd.xlane.f32.xlu0 %v835
        %v837 = vpop.xlane.xlu0 %836
        %v838 = vsel %vm506, %v834, 0.0
        %839 = vadd.xlane.f32.xlu0 %v838
        %v840 = vpop.xlane.xlu0 %839
        %v841 = vrcp.pop %v837
        %v842 = vrcp.pop %v840
        %v843 = vmul.f32 %v832, %v841
        %v844 = vmul.f32 %v834, %v842
        %v845 = vpack.c.bf16 %v843, %v843
        %v846 = vpack.c.bf16 %v844, %v844
        %847 = vrot.lane.b32.xlu0 %v503, 56
        %v848 = vpop.permute.xlu0 %847
        %v850 = vsel %vm506, %v845, 0
        %v853 = vsel %vm631, %v848, 0
        %855 = vmatprep.subr.bf16.mxu0 0
        %856 = vmatpush1.bf16.msra.mxu0 0
        %857 = vmatprep.subr.bf16.mxu0 0
        %858 = vmatpush1.bf16.msra.mxu0 0
        %859 = vmatprep.subr.bf16.mxu0 0
        %860 = vmatpush1.bf16.msra.mxu0 0
        %861 = vmatprep.subr.bf16.mxu0 0
        %862 = vmatpush1.bf16.msra.mxu0 0
        %863 = vmatprep.subr.bf16.mxu0 0
        %864 = vmatpush1.bf16.msra.mxu0 0
        %865 = vmatprep.subr.bf16.mxu0 0
        %866 = vmatpush1.bf16.msra.mxu0 0
        %867 = vmatprep.subr.bf16.mxu0 0
        %868 = vmatpush1.bf16.msra.mxu0 0
        %869 = vmatprep.subr.bf16.mxu0 0
        %870 = vmatpush1.bf16.msra.mxu0 %v853
        %871 = vmatprep.subr.bf16.mxu0 0
        %872 = vmatpush2.bf16.msra.mxu0 0
        %873 = vmatprep.subr.bf16.mxu0 0
        %874 = vmatpush2.bf16.msra.mxu0 0
        %875 = vmatprep.subr.bf16.mxu0 0
        %876 = vmatpush2.bf16.msra.mxu0 0
        %877 = vmatprep.subr.bf16.mxu0 0
        %878 = vmatpush2.bf16.msra.mxu0 0
        %879 = vmatprep.subr.bf16.mxu0 0
        %880 = vmatpush2.bf16.msra.mxu0 0
        %881 = vmatprep.subr.bf16.mxu0 0
        %882 = vmatpush2.bf16.msra.mxu0 0
        %883 = vmatprep.subr.bf16.mxu0 0
        %884 = vmatpush2.bf16.msra.mxu0 0
        %885 = vmatprep.subr.bf16.mxu0 0
        %886 = vmatpush2.bf16.msra.mxu0 0
        %887 = vmatprep.mubr.bf16.mxu0 0
        %888 = vmatmul.mubr.bf16.gmra.mxu0 %v850
        %v889 = vpop.f32.mrf.mxu0
        %v890 = vadd.f32 0.0, %v889
        %v891 = vpop.f32.mrf.mxu0
        %v892 = vpop.f32.mrf.mxu0
        %v893 = vpop.f32.mrf.mxu0
        %894 = vdwg.mxu0
        %895 = vrot.lane.b32.xlu0 %v553, 56
        %v896 = vpop.permute.xlu0 %895
        %v898 = vsel %vm506, %v846, 0
        %v901 = vsel %vm631, %v896, 0
        %903 = vmatprep.subr.bf16.mxu0 0
        %904 = vmatpush1.bf16.msra.mxu0 0
        %905 = vmatprep.subr.bf16.mxu0 0
        %906 = vmatpush1.bf16.msra.mxu0 0
        %907 = vmatprep.subr.bf16.mxu0 0
        %908 = vmatpush1.bf16.msra.mxu0 0
        %909 = vmatprep.subr.bf16.mxu0 0
        %910 = vmatpush1.bf16.msra.mxu0 0
        %911 = vmatprep.subr.bf16.mxu0 0
        %912 = vmatpush1.bf16.msra.mxu0 0
        %913 = vmatprep.subr.bf16.mxu0 0
        %914 = vmatpush1.bf16.msra.mxu0 0
        %915 = vmatprep.subr.bf16.mxu0 0
        %916 = vmatpush1.bf16.msra.mxu0 0
        %917 = vmatprep.subr.bf16.mxu0 0
        %918 = vmatpush1.bf16.msra.mxu0 %v901
        %919 = vmatprep.subr.bf16.mxu0 0
        %920 = vmatpush2.bf16.msra.mxu0 0
        %921 = vmatprep.subr.bf16.mxu0 0
        %922 = vmatpush2.bf16.msra.mxu0 0
        %923 = vmatprep.subr.bf16.mxu0 0
        %924 = vmatpush2.bf16.msra.mxu0 0
        %925 = vmatprep.subr.bf16.mxu0 0
        %926 = vmatpush2.bf16.msra.mxu0 0
        %927 = vmatprep.subr.bf16.mxu0 0
        %928 = vmatpush2.bf16.msra.mxu0 0
        %929 = vmatprep.subr.bf16.mxu0 0
        %930 = vmatpush2.bf16.msra.mxu0 0
        %931 = vmatprep.subr.bf16.mxu0 0
        %932 = vmatpush2.bf16.msra.mxu0 0
        %933 = vmatprep.subr.bf16.mxu0 0
        %934 = vmatpush2.bf16.msra.mxu0 0
        %935 = vmatprep.mubr.bf16.mxu0 0
        %936 = vmatmul.mubr.bf16.gmra.mxu0 %v898
        %v937 = vpop.f32.mrf.mxu0
        %v938 = vadd.f32 0.0, %v937
        %v939 = vpop.f32.mrf.mxu0
        %v940 = vpop.f32.mrf.mxu0
        %v941 = vpop.f32.mrf.mxu0
        %942 = vdwg.mxu0
        %943 = vrot.lane.b32.xlu0 %v498, 112
        %v944 = vpop.permute.xlu0 %943
        %945 = vrot.lane.b32.xlu0 %v503, 80
        %v946 = vpop.permute.xlu0 %945
        %v948 = vsel %vm506, %v944, 0
        %v951 = vsel %vm506, %v946, 0
        %953 = vmatprep.subr.bf16.mxu0 0
        %954 = vmatpush1.bf16.xpose.msra.mxu0 0
        %955 = vmatprep.subr.bf16.mxu0 0
        %956 = vmatpush1.bf16.xpose.msra.mxu0 0
        %957 = vmatprep.subr.bf16.mxu0 0
        %958 = vmatpush1.bf16.xpose.msra.mxu0 0
        %959 = vmatprep.subr.bf16.mxu0 0
        %960 = vmatpush1.bf16.xpose.msra.mxu0 0
        %961 = vmatprep.subr.bf16.mxu0 0
        %962 = vmatpush1.bf16.xpose.msra.mxu0 0
        %963 = vmatprep.subr.bf16.mxu0 0
        %964 = vmatpush1.bf16.xpose.msra.mxu0 0
        %965 = vmatprep.subr.bf16.mxu0 0
        %966 = vmatpush1.bf16.xpose.msra.mxu0 0
        %967 = vmatprep.subr.bf16.mxu0 0
        %968 = vmatpush1.bf16.xpose.msra.mxu0 %v951
        %969 = vmatprep.subr.bf16.mxu0 0
        %970 = vmatpush2.bf16.xpose.msra.mxu0 0
        %971 = vmatprep.subr.bf16.mxu0 0
        %972 = vmatpush2.bf16.xpose.msra.mxu0 0
        %973 = vmatprep.subr.bf16.mxu0 0
        %974 = vmatpush2.bf16.xpose.msra.mxu0 0
        %975 = vmatprep.subr.bf16.mxu0 0
        %976 = vmatpush2.bf16.xpose.msra.mxu0 0
        %977 = vmatprep.subr.bf16.mxu0 0
        %978 = vmatpush2.bf16.xpose.msra.mxu0 0
        %979 = vmatprep.subr.bf16.mxu0 0
        %980 = vmatpush2.bf16.xpose.msra.mxu0 0
        %981 = vmatprep.subr.bf16.mxu0 0
        %982 = vmatpush2.bf16.xpose.msra.mxu0 0
        %983 = vmatprep.subr.bf16.mxu0 0
        %984 = vmatpush2.bf16.xpose.msra.mxu0 0
        %985 = vmatprep.mubr.bf16.mxu0 0
        %986 = vmatmul.mubr.bf16.gmra.mxu0 %v948
        %v987 = vpop.f32.mrf.mxu0
        %v988 = vadd.f32 0.0, %v987
        %v989 = vpop.f32.mrf.mxu0
        %v990 = vpop.f32.mrf.mxu0
        %v991 = vpop.f32.mrf.mxu0
        %992 = vdwg.mxu0
        %993 = vrot.lane.b32.xlu0 %v499, 112
        %v994 = vpop.permute.xlu0 %993
        %995 = vrot.lane.b32.xlu0 %v553, 80
        %v996 = vpop.permute.xlu0 %995
        %v998 = vsel %vm506, %v994, 0
        %v1001 = vsel %vm506, %v996, 0
        %1003 = vmatprep.subr.bf16.mxu0 0
        %1004 = vmatpush1.bf16.xpose.msra.mxu0 0
        %1005 = vmatprep.subr.bf16.mxu0 0
        %1006 = vmatpush1.bf16.xpose.msra.mxu0 0
        %1007 = vmatprep.subr.bf16.mxu0 0
        %1008 = vmatpush1.bf16.xpose.msra.mxu0 0
        %1009 = vmatprep.subr.bf16.mxu0 0
        %1010 = vmatpush1.bf16.xpose.msra.mxu0 0
        %1011 = vmatprep.subr.bf16.mxu0 0
        %1012 = vmatpush1.bf16.xpose.msra.mxu0 0
        %1013 = vmatprep.subr.bf16.mxu0 0
        %1014 = vmatpush1.bf16.xpose.msra.mxu0 0
        %1015 = vmatprep.subr.bf16.mxu0 0
        %1016 = vmatpush1.bf16.xpose.msra.mxu0 0
        %1017 = vmatprep.subr.bf16.mxu0 0
        %1018 = vmatpush1.bf16.xpose.msra.mxu0 %v1001
        %1019 = vmatprep.subr.bf16.mxu0 0
        %1020 = vmatpush2.bf16.xpose.msra.mxu0 0
        %1021 = vmatprep.subr.bf16.mxu0 0
        %1022 = vmatpush2.bf16.xpose.msra.mxu0 0
        %1023 = vmatprep.subr.bf16.mxu0 0
        %1024 = vmatpush2.bf16.xpose.msra.mxu0 0
        %1025 = vmatprep.subr.bf16.mxu0 0
        %1026 = vmatpush2.bf16.xpose.msra.mxu0 0
        %1027 = vmatprep.subr.bf16.mxu0 0
        %1028 = vmatpush2.bf16.xpose.msra.mxu0 0
        %1029 = vmatprep.subr.bf16.mxu0 0
        %1030 = vmatpush2.bf16.xpose.msra.mxu0 0
        %1031 = vmatprep.subr.bf16.mxu0 0
        %1032 = vmatpush2.bf16.xpose.msra.mxu0 0
        %1033 = vmatprep.subr.bf16.mxu0 0
        %1034 = vmatpush2.bf16.xpose.msra.mxu0 0
        %1035 = vmatprep.mubr.bf16.mxu0 0
        %1036 = vmatmul.mubr.bf16.gmra.mxu0 %v998
        %v1037 = vpop.f32.mrf.mxu0
        %v1038 = vadd.f32 0.0, %v1037
        %v1039 = vpop.f32.mrf.mxu0
        %v1040 = vpop.f32.mrf.mxu0
        %v1041 = vpop.f32.mrf.mxu0
        %1042 = vdwg.mxu0
        %v1043 = vsel %vm506, %v988, -inf
        %1044 = vmax.xlane.f32.xlu0 %v1043
        %v1045 = vpop.xlane.xlu0 %1044
        %v1046 = vsel %vm506, %v1038, -inf
        %1047 = vmax.xlane.f32.xlu0 %v1046
        %v1048 = vpop.xlane.xlu0 %1047
        %v1049 = vsub.f32 %v988, %v1045
        %v1050 = vsub.f32 %v1038, %v1048
        %v1051 = vmul.f32 %v1049, 1.442695
        %v1052 = vpow.pop %v1051
        %v1053 = vmul.f32 %v1050, 1.442695
        %v1054 = vpow.pop %v1053
        %v1055 = vsel %vm506, %v1052, 0.0
        %1056 = vadd.xlane.f32.xlu0 %v1055
        %v1057 = vpop.xlane.xlu0 %1056
        %v1058 = vsel %vm506, %v1054, 0.0
        %1059 = vadd.xlane.f32.xlu0 %v1058
        %v1060 = vpop.xlane.xlu0 %1059
        %v1061 = vrcp.pop %v1057
        %v1062 = vrcp.pop %v1060
        %v1063 = vmul.f32 %v1052, %v1061
        %v1064 = vmul.f32 %v1054, %v1062
        %v1065 = vpack.c.bf16 %v1063, %v1063
        %v1066 = vpack.c.bf16 %v1064, %v1064
        %1067 = vrot.lane.b32.xlu0 %v503, 48
        %v1068 = vpop.permute.xlu0 %1067
        %v1070 = vsel %vm506, %v1065, 0
        %v1073 = vsel %vm631, %v1068, 0
        %1075 = vmatprep.subr.bf16.mxu0 0
        %1076 = vmatpush1.bf16.msra.mxu0 0
        %1077 = vmatprep.subr.bf16.mxu0 0
        %1078 = vmatpush1.bf16.msra.mxu0 0
        %1079 = vmatprep.subr.bf16.mxu0 0
        %1080 = vmatpush1.bf16.msra.mxu0 0
        %1081 = vmatprep.subr.bf16.mxu0 0
        %1082 = vmatpush1.bf16.msra.mxu0 0
        %1083 = vmatprep.subr.bf16.mxu0 0
        %1084 = vmatpush1.bf16.msra.mxu0 0
        %1085 = vmatprep.subr.bf16.mxu0 0
        %1086 = vmatpush1.bf16.msra.mxu0 0
        %1087 = vmatprep.subr.bf16.mxu0 0
        %1088 = vmatpush1.bf16.msra.mxu0 0
        %1089 = vmatprep.subr.bf16.mxu0 0
        %1090 = vmatpush1.bf16.msra.mxu0 %v1073
        %1091 = vmatprep.subr.bf16.mxu0 0
        %1092 = vmatpush2.bf16.msra.mxu0 0
        %1093 = vmatprep.subr.bf16.mxu0 0
        %1094 = vmatpush2.bf16.msra.mxu0 0
        %1095 = vmatprep.subr.bf16.mxu0 0
        %1096 = vmatpush2.bf16.msra.mxu0 0
        %1097 = vmatprep.subr.bf16.mxu0 0
        %1098 = vmatpush2.bf16.msra.mxu0 0
        %1099 = vmatprep.subr.bf16.mxu0 0
        %1100 = vmatpush2.bf16.msra.mxu0 0
        %1101 = vmatprep.subr.bf16.mxu0 0
        %1102 = vmatpush2.bf16.msra.mxu0 0
        %1103 = vmatprep.subr.bf16.mxu0 0
        %1104 = vmatpush2.bf16.msra.mxu0 0
        %1105 = vmatprep.subr.bf16.mxu0 0
        %1106 = vmatpush2.bf16.msra.mxu0 0
        %1107 = vmatprep.mubr.bf16.mxu0 0
        %1108 = vmatmul.mubr.bf16.gmra.mxu0 %v1070
        %v1109 = vpop.f32.mrf.mxu0
        %v1110 = vadd.f32 0.0, %v1109
        %v1111 = vpop.f32.mrf.mxu0
        %v1112 = vpop.f32.mrf.mxu0
        %v1113 = vpop.f32.mrf.mxu0
        %1114 = vdwg.mxu0
        %1115 = vrot.lane.b32.xlu0 %v553, 48
        %v1116 = vpop.permute.xlu0 %1115
        %v1118 = vsel %vm506, %v1066, 0
        %v1121 = vsel %vm631, %v1116, 0
        %1123 = vmatprep.subr.bf16.mxu0 0
        %1124 = vmatpush1.bf16.msra.mxu0 0
        %1125 = vmatprep.subr.bf16.mxu0 0
        %1126 = vmatpush1.bf16.msra.mxu0 0
        %1127 = vmatprep.subr.bf16.mxu0 0
        %1128 = vmatpush1.bf16.msra.mxu0 0
        %1129 = vmatprep.subr.bf16.mxu0 0
        %1130 = vmatpush1.bf16.msra.mxu0 0
        %1131 = vmatprep.subr.bf16.mxu0 0
        %1132 = vmatpush1.bf16.msra.mxu0 0
        %1133 = vmatprep.subr.bf16.mxu0 0
        %1134 = vmatpush1.bf16.msra.mxu0 0
        %1135 = vmatprep.subr.bf16.mxu0 0
        %1136 = vmatpush1.bf16.msra.mxu0 0
        %1137 = vmatprep.subr.bf16.mxu0 0
        %1138 = vmatpush1.bf16.msra.mxu0 %v1121
        %1139 = vmatprep.subr.bf16.mxu0 0
        %1140 = vmatpush2.bf16.msra.mxu0 0
        %1141 = vmatprep.subr.bf16.mxu0 0
        %1142 = vmatpush2.bf16.msra.mxu0 0
        %1143 = vmatprep.subr.bf16.mxu0 0
        %1144 = vmatpush2.bf16.msra.mxu0 0
        %1145 = vmatprep.subr.bf16.mxu0 0
        %1146 = vmatpush2.bf16.msra.mxu0 0
        %1147 = vmatprep.subr.bf16.mxu0 0
        %1148 = vmatpush2.bf16.msra.mxu0 0
        %1149 = vmatprep.subr.bf16.mxu0 0
        %1150 = vmatpush2.bf16.msra.mxu0 0
        %1151 = vmatprep.subr.bf16.mxu0 0
        %1152 = vmatpush2.bf16.msra.mxu0 0
        %1153 = vmatprep.subr.bf16.mxu0 0
        %1154 = vmatpush2.bf16.msra.mxu0 0
        %1155 = vmatprep.mubr.bf16.mxu0 0
        %1156 = vmatmul.mubr.bf16.gmra.mxu0 %v1118
        %v1157 = vpop.f32.mrf.mxu0
        %v1158 = vadd.f32 0.0, %v1157
        %v1159 = vpop.f32.mrf.mxu0
        %v1160 = vpop.f32.mrf.mxu0
        %v1161 = vpop.f32.mrf.mxu0
        %1162 = vdwg.mxu0
        %1163 = vrot.lane.b32.xlu0 %v498, 104
        %v1164 = vpop.permute.xlu0 %1163
        %1165 = vrot.lane.b32.xlu0 %v503, 72
        %v1166 = vpop.permute.xlu0 %1165
        %v1168 = vsel %vm506, %v1164, 0
        %v1171 = vsel %vm506, %v1166, 0
        %1173 = vmatprep.subr.bf16.mxu0 0
        %1174 = vmatpush1.bf16.xpose.msra.mxu0 0
        %1175 = vmatprep.subr.bf16.mxu0 0
        %1176 = vmatpush1.bf16.xpose.msra.mxu0 0
        %1177 = vmatprep.subr.bf16.mxu0 0
        %1178 = vmatpush1.bf16.xpose.msra.mxu0 0
        %1179 = vmatprep.subr.bf16.mxu0 0
        %1180 = vmatpush1.bf16.xpose.msra.mxu0 0
        %1181 = vmatprep.subr.bf16.mxu0 0
        %1182 = vmatpush1.bf16.xpose.msra.mxu0 0
        %1183 = vmatprep.subr.bf16.mxu0 0
        %1184 = vmatpush1.bf16.xpose.msra.mxu0 0
        %1185 = vmatprep.subr.bf16.mxu0 0
        %1186 = vmatpush1.bf16.xpose.msra.mxu0 0
        %1187 = vmatprep.subr.bf16.mxu0 0
        %1188 = vmatpush1.bf16.xpose.msra.mxu0 %v1171
        %1189 = vmatprep.subr.bf16.mxu0 0
        %1190 = vmatpush2.bf16.xpose.msra.mxu0 0
        %1191 = vmatprep.subr.bf16.mxu0 0
        %1192 = vmatpush2.bf16.xpose.msra.mxu0 0
        %1193 = vmatprep.subr.bf16.mxu0 0
        %1194 = vmatpush2.bf16.xpose.msra.mxu0 0
        %1195 = vmatprep.subr.bf16.mxu0 0
        %1196 = vmatpush2.bf16.xpose.msra.mxu0 0
        %1197 = vmatprep.subr.bf16.mxu0 0
        %1198 = vmatpush2.bf16.xpose.msra.mxu0 0
        %1199 = vmatprep.subr.bf16.mxu0 0
        %1200 = vmatpush2.bf16.xpose.msra.mxu0 0
        %1201 = vmatprep.subr.bf16.mxu0 0
        %1202 = vmatpush2.bf16.xpose.msra.mxu0 0
        %1203 = vmatprep.subr.bf16.mxu0 0
        %1204 = vmatpush2.bf16.xpose.msra.mxu0 0
        %1205 = vmatprep.mubr.bf16.mxu0 0
        %1206 = vmatmul.mubr.bf16.gmra.mxu0 %v1168
        %v1207 = vpop.f32.mrf.mxu0
        %v1208 = vadd.f32 0.0, %v1207
        %v1209 = vpop.f32.mrf.mxu0
        %v1210 = vpop.f32.mrf.mxu0
        %v1211 = vpop.f32.mrf.mxu0
        %1212 = vdwg.mxu0
        %1213 = vrot.lane.b32.xlu0 %v499, 104
        %v1214 = vpop.permute.xlu0 %1213
        %1215 = vrot.lane.b32.xlu0 %v553, 72
        %v1216 = vpop.permute.xlu0 %1215
        %v1218 = vsel %vm506, %v1214, 0
        %v1221 = vsel %vm506, %v1216, 0
        %1223 = vmatprep.subr.bf16.mxu0 0
        %1224 = vmatpush1.bf16.xpose.msra.mxu0 0
        %1225 = vmatprep.subr.bf16.mxu0 0
        %1226 = vmatpush1.bf16.xpose.msra.mxu0 0
        %1227 = vmatprep.subr.bf16.mxu0 0
        %1228 = vmatpush1.bf16.xpose.msra.mxu0 0
        %1229 = vmatprep.subr.bf16.mxu0 0
        %1230 = vmatpush1.bf16.xpose.msra.mxu0 0
        %1231 = vmatprep.subr.bf16.mxu0 0
        %1232 = vmatpush1.bf16.xpose.msra.mxu0 0
        %1233 = vmatprep.subr.bf16.mxu0 0
        %1234 = vmatpush1.bf16.xpose.msra.mxu0 0
        %1235 = vmatprep.subr.bf16.mxu0 0
        %1236 = vmatpush1.bf16.xpose.msra.mxu0 0
        %1237 = vmatprep.subr.bf16.mxu0 0
        %1238 = vmatpush1.bf16.xpose.msra.mxu0 %v1221
        %1239 = vmatprep.subr.bf16.mxu0 0
        %1240 = vmatpush2.bf16.xpose.msra.mxu0 0
        %1241 = vmatprep.subr.bf16.mxu0 0
        %1242 = vmatpush2.bf16.xpose.msra.mxu0 0
        %1243 = vmatprep.subr.bf16.mxu0 0
        %1244 = vmatpush2.bf16.xpose.msra.mxu0 0
        %1245 = vmatprep.subr.bf16.mxu0 0
        %1246 = vmatpush2.bf16.xpose.msra.mxu0 0
        %1247 = vmatprep.subr.bf16.mxu0 0
        %1248 = vmatpush2.bf16.xpose.msra.mxu0 0
        %1249 = vmatprep.subr.bf16.mxu0 0
        %1250 = vmatpush2.bf16.xpose.msra.mxu0 0
        %1251 = vmatprep.subr.bf16.mxu0 0
        %1252 = vmatpush2.bf16.xpose.msra.mxu0 0
        %1253 = vmatprep.subr.bf16.mxu0 0
        %1254 = vmatpush2.bf16.xpose.msra.mxu0 0
        %1255 = vmatprep.mubr.bf16.mxu0 0
        %1256 = vmatmul.mubr.bf16.gmra.mxu0 %v1218
        %v1257 = vpop.f32.mrf.mxu0
        %v1258 = vadd.f32 0.0, %v1257
        %v1259 = vpop.f32.mrf.mxu0
        %v1260 = vpop.f32.mrf.mxu0
        %v1261 = vpop.f32.mrf.mxu0
        %1262 = vdwg.mxu0
        %v1263 = vsel %vm506, %v1208, -inf
        %1264 = vmax.xlane.f32.xlu0 %v1263
        %v1265 = vpop.xlane.xlu0 %1264
        %v1266 = vsel %vm506, %v1258, -inf
        %1267 = vmax.xlane.f32.xlu0 %v1266
        %v1268 = vpop.xlane.xlu0 %1267
        %v1269 = vsub.f32 %v1208, %v1265
        %v1270 = vsub.f32 %v1258, %v1268
        %v1271 = vmul.f32 %v1269, 1.442695
        %v1272 = vpow.pop %v1271
        %v1273 = vmul.f32 %v1270, 1.442695
        %v1274 = vpow.pop %v1273
        %v1275 = vsel %vm506, %v1272, 0.0
        %1276 = vadd.xlane.f32.xlu0 %v1275
        %v1277 = vpop.xlane.xlu0 %1276
        %v1278 = vsel %vm506, %v1274, 0.0
        %1279 = vadd.xlane.f32.xlu0 %v1278
        %v1280 = vpop.xlane.xlu0 %1279
        %v1281 = vrcp.pop %v1277
        %v1282 = vrcp.pop %v1280
        %v1283 = vmul.f32 %v1272, %v1281
        %v1284 = vmul.f32 %v1274, %v1282
        %v1285 = vpack.c.bf16 %v1283, %v1283
        %v1286 = vpack.c.bf16 %v1284, %v1284
        %1287 = vrot.lane.b32.xlu0 %v503, 40
        %v1288 = vpop.permute.xlu0 %1287
        %v1290 = vsel %vm506, %v1285, 0
        %v1293 = vsel %vm631, %v1288, 0
        %1295 = vmatprep.subr.bf16.mxu0 0
        %1296 = vmatpush1.bf16.msra.mxu0 0
        %1297 = vmatprep.subr.bf16.mxu0 0
        %1298 = vmatpush1.bf16.msra.mxu0 0
        %1299 = vmatprep.subr.bf16.mxu0 0
        %1300 = vmatpush1.bf16.msra.mxu0 0
        %1301 = vmatprep.subr.bf16.mxu0 0
        %1302 = vmatpush1.bf16.msra.mxu0 0
        %1303 = vmatprep.subr.bf16.mxu0 0
        %1304 = vmatpush1.bf16.msra.mxu0 0
        %1305 = vmatprep.subr.bf16.mxu0 0
        %1306 = vmatpush1.bf16.msra.mxu0 0
        %1307 = vmatprep.subr.bf16.mxu0 0
        %1308 = vmatpush1.bf16.msra.mxu0 0
        %1309 = vmatprep.subr.bf16.mxu0 0
        %1310 = vmatpush1.bf16.msra.mxu0 %v1293
        %1311 = vmatprep.subr.bf16.mxu0 0
        %1312 = vmatpush2.bf16.msra.mxu0 0
        %1313 = vmatprep.subr.bf16.mxu0 0
        %1314 = vmatpush2.bf16.msra.mxu0 0
        %1315 = vmatprep.subr.bf16.mxu0 0
        %1316 = vmatpush2.bf16.msra.mxu0 0
        %1317 = vmatprep.subr.bf16.mxu0 0
        %1318 = vmatpush2.bf16.msra.mxu0 0
        %1319 = vmatprep.subr.bf16.mxu0 0
        %1320 = vmatpush2.bf16.msra.mxu0 0
        %1321 = vmatprep.subr.bf16.mxu0 0
        %1322 = vmatpush2.bf16.msra.mxu0 0
        %1323 = vmatprep.subr.bf16.mxu0 0
        %1324 = vmatpush2.bf16.msra.mxu0 0
        %1325 = vmatprep.subr.bf16.mxu0 0
        %1326 = vmatpush2.bf16.msra.mxu0 0
        %1327 = vmatprep.mubr.bf16.mxu0 0
        %1328 = vmatmul.mubr.bf16.gmra.mxu0 %v1290
        %v1329 = vpop.f32.mrf.mxu0
        %v1330 = vadd.f32 0.0, %v1329
        %v1331 = vpop.f32.mrf.mxu0
        %v1332 = vpop.f32.mrf.mxu0
        %v1333 = vpop.f32.mrf.mxu0
        %1334 = vdwg.mxu0
        %1335 = vrot.lane.b32.xlu0 %v553, 40
        %v1336 = vpop.permute.xlu0 %1335
        %v1338 = vsel %vm506, %v1286, 0
        %v1341 = vsel %vm631, %v1336, 0
        %1343 = vmatprep.subr.bf16.mxu0 0
        %1344 = vmatpush1.bf16.msra.mxu0 0
        %1345 = vmatprep.subr.bf16.mxu0 0
        %1346 = vmatpush1.bf16.msra.mxu0 0
        %1347 = vmatprep.subr.bf16.mxu0 0
        %1348 = vmatpush1.bf16.msra.mxu0 0
        %1349 = vmatprep.subr.bf16.mxu0 0
        %1350 = vmatpush1.bf16.msra.mxu0 0
        %1351 = vmatprep.subr.bf16.mxu0 0
        %1352 = vmatpush1.bf16.msra.mxu0 0
        %1353 = vmatprep.subr.bf16.mxu0 0
        %1354 = vmatpush1.bf16.msra.mxu0 0
        %1355 = vmatprep.subr.bf16.mxu0 0
        %1356 = vmatpush1.bf16.msra.mxu0 0
        %1357 = vmatprep.subr.bf16.mxu0 0
        %1358 = vmatpush1.bf16.msra.mxu0 %v1341
        %1359 = vmatprep.subr.bf16.mxu0 0
        %1360 = vmatpush2.bf16.msra.mxu0 0
        %1361 = vmatprep.subr.bf16.mxu0 0
        %1362 = vmatpush2.bf16.msra.mxu0 0
        %1363 = vmatprep.subr.bf16.mxu0 0
        %1364 = vmatpush2.bf16.msra.mxu0 0
        %1365 = vmatprep.subr.bf16.mxu0 0
        %1366 = vmatpush2.bf16.msra.mxu0 0
        %1367 = vmatprep.subr.bf16.mxu0 0
        %1368 = vmatpush2.bf16.msra.mxu0 0
        %1369 = vmatprep.subr.bf16.mxu0 0
        %1370 = vmatpush2.bf16.msra.mxu0 0
        %1371 = vmatprep.subr.bf16.mxu0 0
        %1372 = vmatpush2.bf16.msra.mxu0 0
        %1373 = vmatprep.subr.bf16.mxu0 0
        %1374 = vmatpush2.bf16.msra.mxu0 0
        %1375 = vmatprep.mubr.bf16.mxu0 0
        %1376 = vmatmul.mubr.bf16.gmra.mxu0 %v1338
        %v1377 = vpop.f32.mrf.mxu0
        %v1378 = vadd.f32 0.0, %v1377
        %v1379 = vpop.f32.mrf.mxu0
        %v1380 = vpop.f32.mrf.mxu0
        %v1381 = vpop.f32.mrf.mxu0
        %1382 = vdwg.mxu0
        %1385 = vrot.lane.b32.xlu0 %v890, 8
        %v1386 = vpop.permute.xlu0 %1385
        %1387 = vrot.lane.b32.xlu0 %v938, 8
        %v1388 = vpop.permute.xlu0 %1387
        %1393 = vrot.lane.b32.xlu0 %v1110, 16
        %v1394 = vpop.permute.xlu0 %1393
        %1395 = vrot.lane.b32.xlu0 %v1158, 16
        %v1396 = vpop.permute.xlu0 %1395
        %1401 = vrot.lane.b32.xlu0 %v1330, 24
        %v1402 = vpop.permute.xlu0 %1401
        %1403 = vrot.lane.b32.xlu0 %v1378, 24
        %v1404 = vpop.permute.xlu0 %1403
        %v1407 = vsel %vm506, %v670, %v1386
        %v1408 = vsel %vm506, %v718, %v1388
        %vm1409 = vcmask 130048
        %v1410 = vsel %vm1409, %v1407, %v1394
        %v1411 = vsel %vm1409, %v1408, %v1396
        %vm1412 = vcmask 195584
        %v1413 = vsel %vm1412, %v1410, %v1402
        %v1414 = vsel %vm1412, %v1411, %v1404
        %v1415 = vpack.c.bf16 %v1414, %v1413
        %v1416 = vld [vmem:[%s365] sm:$0xf]
        %v1417 = vld [vmem:[%s365 + $0x4] sm:$0xf]
        %v1418 = vld [vmem:[%s365 + $0x8] sm:$0xf]
        %v1419 = vld [vmem:[%s365 + $0xc] sm:$0xf]
        %v1420 = vlaneseq
        %v1421 = vshrl.u32 %v1420, 7
        %v1422 = vsub.s32 2, %v1421
        %v1423 = vrot.slane %v387, %v1422
        %v1428 = vunpack.c.l.b16 %v1416
        %v1429 = vunpack.c.l.b16 %v1417
        %v1430 = vunpack.c.l.b16 %v1418
        %v1431 = vunpack.c.l.b16 %v1419
        %v1432 = vpack.c.b16 %v1429, %v1428
        %v1433 = vpack.c.b16 %v1431, %v1430
        %v1437 = vsel %vm390, %v1415, 0
        %1439 = vmatprep.subr.bf16.mxu0 0
        %1440 = vmatpush1.bf16.msra.mxu0 0
        %1441 = vmatprep.subr.bf16.mxu0 0
        %1442 = vmatpush1.bf16.msra.mxu0 0
        %1443 = vmatprep.subr.bf16.mxu0 0
        %1444 = vmatpush1.bf16.msra.mxu0 0
        %1445 = vmatprep.subr.bf16.mxu0 0
        %1446 = vmatpush1.bf16.msra.mxu0 0
        %1447 = vmatprep.subr.bf16.mxu0 0
        %1448 = vmatpush1.bf16.msra.mxu0 0
        %1449 = vmatprep.subr.bf16.mxu0 0
        %1450 = vmatpush1.bf16.msra.mxu0 0
        %1451 = vmatprep.subr.bf16.mxu0 0
        %1452 = vmatpush1.bf16.msra.mxu0 %v1433
        %1453 = vmatprep.subr.bf16.mxu0 0
        %1454 = vmatpush1.bf16.msra.mxu0 %v1432
        %1455 = vmatprep.subr.bf16.mxu0 0
        %1456 = vmatpush2.bf16.msra.mxu0 0
        %1457 = vmatprep.subr.bf16.mxu0 0
        %1458 = vmatpush2.bf16.msra.mxu0 0
        %1459 = vmatprep.subr.bf16.mxu0 0
        %1460 = vmatpush2.bf16.msra.mxu0 0
        %1461 = vmatprep.subr.bf16.mxu0 0
        %1462 = vmatpush2.bf16.msra.mxu0 0
        %1463 = vmatprep.subr.bf16.mxu0 0
        %1464 = vmatpush2.bf16.msra.mxu0 0
        %1465 = vmatprep.subr.bf16.mxu0 0
        %1466 = vmatpush2.bf16.msra.mxu0 0
        %1467 = vmatprep.subr.bf16.mxu0 0
        %1468 = vmatpush2.bf16.msra.mxu0 0
        %1469 = vmatprep.subr.bf16.mxu0 0
        %1470 = vmatpush2.bf16.msra.mxu0 0
        %1471 = vmatprep.mubr.bf16.mxu0 0
        %1472 = vmatmul.mubr.bf16.gmra.mxu0 %v1437
        %v1473 = vpop.f32.mrf.mxu0
        %v1474 = vadd.f32 %v1423, %v1473
        %v1475 = vpop.f32.mrf.mxu0
        %v1476 = vpop.f32.mrf.mxu0
        %v1477 = vadd.f32 %v1423, %v1476
        %v1478 = vpop.f32.mrf.mxu0
        %1479 = vdwg.mxu0
        %v1480 = vadd.f32 %v388, %v1474
        %v1481 = vadd.f32 %v389, %v1477
        %v1482 = vsel %vm390, %v1480, 0.0
        %1483 = vadd.xlane.f32.xlu0 %v1482
        %v1484 = vpop.xlane.xlu0 %1483
        %v1485 = vsel %vm390, %v1481, 0.0
        %1486 = vadd.xlane.f32.xlu0 %v1485
        %v1487 = vpop.xlane.xlu0 %1486
        %v1488 = vmul.f32 %v1484, %v397
        %v1489 = vmul.f32 %v1487, %v397
        %v1490 = vsub.f32 %v1480, %v1488
        %v1491 = vsub.f32 %v1481, %v1489
        %v1492 = vmul.f32 %v1490, %v1490
        %v1493 = vmul.f32 %v1491, %v1491
        %v1494 = vsel %vm390, %v1492, 0.0
        %1495 = vadd.xlane.f32.xlu0 %v1494
        %v1496 = vpop.xlane.xlu0 %1495
        %v1497 = vsel %vm390, %v1493, 0.0
        %1498 = vadd.xlane.f32.xlu0 %v1497
        %v1499 = vpop.xlane.xlu0 %1498
        %v1500 = vmul.f32 %v1496, %v397
        %v1501 = vmul.f32 %v1499, %v397
        %v1502 = vadd.f32 %v1500, 1e-05
        %v1503 = vadd.f32 %v1501, 1e-05
        %v1504 = vrsqrt.pop %v1502
        %v1505 = vrsqrt.pop %v1503
        %v1506 = vmul.f32 %v1490, %v1504
        %v1507 = vmul.f32 %v1491, %v1505
        %v1508 = vlaneseq
        %v1509 = vshrl.u32 %v1508, 7
        %v1510 = vsub.s32 3, %v1509
        %v1511 = vrot.slane %v387, %v1510
        %v1512 = vmul.f32 %v1506, %v1511
        %v1513 = vmul.f32 %v1507, %v1511
        %v1514 = vlaneseq
        %v1515 = vshrl.u32 %v1514, 7
        %v1516 = vsub.s32 4, %v1515
        %v1517 = vrot.slane %v387, %v1516
        %v1518 = vadd.f32 %v1512, %v1517
        %v1519 = vadd.f32 %v1513, %v1517
        %v1520 = vpack.c.bf16 %v1519, %v1518
        %v1521 = vld [vmem:[%s370] sm:$0xf]
        %v1522 = vld [vmem:[%s370 + $0x4] sm:$0xf]
        %v1523 = vld [vmem:[%s370 + $0x8] sm:$0xf]
        %v1524 = vld [vmem:[%s370 + $0xc] sm:$0xf]
        %v1525 = vlaneseq
        %v1526 = vshrl.u32 %v1525, 7
        %v1527 = vsub.s32 5, %v1526
        %v1528 = vrot.slane %v387, %v1527
        %v1533 = vunpack.c.l.b16 %v1521
        %v1534 = vunpack.c.l.b16 %v1522
        %v1535 = vunpack.c.l.b16 %v1523
        %v1536 = vunpack.c.l.b16 %v1524
        %v1537 = vpack.c.b16 %v1534, %v1533
        %v1538 = vpack.c.b16 %v1536, %v1535
        %v1542 = vsel %vm390, %v1520, 0
        %1544 = vmatprep.subr.bf16.mxu0 0
        %1545 = vmatpush1.bf16.msra.mxu0 0
        %1546 = vmatprep.subr.bf16.mxu0 0
        %1547 = vmatpush1.bf16.msra.mxu0 0
        %1548 = vmatprep.subr.bf16.mxu0 0
        %1549 = vmatpush1.bf16.msra.mxu0 0
        %1550 = vmatprep.subr.bf16.mxu0 0
        %1551 = vmatpush1.bf16.msra.mxu0 0
        %1552 = vmatprep.subr.bf16.mxu0 0
        %1553 = vmatpush1.bf16.msra.mxu0 0
        %1554 = vmatprep.subr.bf16.mxu0 0
        %1555 = vmatpush1.bf16.msra.mxu0 0
        %1556 = vmatprep.subr.bf16.mxu0 0
        %1557 = vmatpush1.bf16.msra.mxu0 %v1538
        %1558 = vmatprep.subr.bf16.mxu0 0
        %1559 = vmatpush1.bf16.msra.mxu0 %v1537
        %1560 = vmatprep.subr.bf16.mxu0 0
        %1561 = vmatpush2.bf16.msra.mxu0 0
        %1562 = vmatprep.subr.bf16.mxu0 0
        %1563 = vmatpush2.bf16.msra.mxu0 0
        %1564 = vmatprep.subr.bf16.mxu0 0
        %1565 = vmatpush2.bf16.msra.mxu0 0
        %1566 = vmatprep.subr.bf16.mxu0 0
        %1567 = vmatpush2.bf16.msra.mxu0 0
        %1568 = vmatprep.subr.bf16.mxu0 0
        %1569 = vmatpush2.bf16.msra.mxu0 0
        %1570 = vmatprep.subr.bf16.mxu0 0
        %1571 = vmatpush2.bf16.msra.mxu0 0
        %1572 = vmatprep.subr.bf16.mxu0 0
        %1573 = vmatpush2.bf16.msra.mxu0 0
        %1574 = vmatprep.subr.bf16.mxu0 0
        %1575 = vmatpush2.bf16.msra.mxu0 0
        %1576 = vmatprep.mubr.bf16.mxu0 0
        %1577 = vmatmul.mubr.bf16.gmra.mxu0 %v1542
        %v1578 = vpop.f32.mrf.mxu0
        %v1579 = vadd.f32 %v1528, %v1578
        %v1580 = vpop.f32.mrf.mxu0
        %v1581 = vpop.f32.mrf.mxu0
        %v1582 = vadd.f32 %v1528, %v1581
        %v1583 = vpop.f32.mrf.mxu0
        %1584 = vdwg.mxu0
        %v1585 = vmax.f32 %v1579, 0.0
        %v1586 = vmax.f32 %v1582, 0.0
        %v1587 = vpack.c.bf16 %v1586, %v1585
        %v1588 = vld [vmem:[%s375] sm:$0xf]
        %v1589 = vld [vmem:[%s375 + $0x4] sm:$0xf]
        %v1590 = vld [vmem:[%s375 + $0x8] sm:$0xf]
        %v1591 = vld [vmem:[%s375 + $0xc] sm:$0xf]
        %v1592 = vld [vmem:[%s375 + $0x10] sm:$0xf]
        %v1593 = vld [vmem:[%s375 + $0x14] sm:$0xf]
        %v1594 = vld [vmem:[%s375 + $0x18] sm:$0xf]
        %v1595 = vld [vmem:[%s375 + $0x1c] sm:$0xf]
        %v1596 = vlaneseq
        %v1597 = vshrl.u32 %v1596, 7
        %v1598 = vsub.s32 6, %v1597
        %v1599 = vrot.slane %v387, %v1598
        %v1608 = vunpack.c.l.b16 %v1588
        %v1609 = vunpack.c.l.b16 %v1589
        %v1610 = vunpack.c.l.b16 %v1590
        %v1611 = vunpack.c.l.b16 %v1591
        %v1612 = vunpack.c.l.b16 %v1592
        %v1613 = vunpack.c.l.b16 %v1593
        %v1614 = vunpack.c.l.b16 %v1594
        %v1615 = vunpack.c.l.b16 %v1595
        %v1616 = vpack.c.b16 %v1609, %v1608
        %v1617 = vpack.c.b16 %v1611, %v1610
        %v1618 = vpack.c.b16 %v1613, %v1612
        %v1619 = vpack.c.b16 %v1615, %v1614
        %vm1624 = vcmask 523264
        %v1626 = vsel %vm1624, %v1587, 0
        %1628 = vmatprep.subr.bf16.mxu0 0
        %1629 = vmatpush1.bf16.msra.mxu0 0
        %1630 = vmatprep.subr.bf16.mxu0 0
        %1631 = vmatpush1.bf16.msra.mxu0 0
        %1632 = vmatprep.subr.bf16.mxu0 0
        %1633 = vmatpush1.bf16.msra.mxu0 0
        %1634 = vmatprep.subr.bf16.mxu0 0
        %1635 = vmatpush1.bf16.msra.mxu0 0
        %1636 = vmatprep.subr.bf16.mxu0 0
        %1637 = vmatpush1.bf16.msra.mxu0 %v1619
        %1638 = vmatprep.subr.bf16.mxu0 0
        %1639 = vmatpush1.bf16.msra.mxu0 %v1618
        %1640 = vmatprep.subr.bf16.mxu0 0
        %1641 = vmatpush1.bf16.msra.mxu0 %v1617
        %1642 = vmatprep.subr.bf16.mxu0 0
        %1643 = vmatpush1.bf16.msra.mxu0 %v1616
        %1644 = vmatprep.subr.bf16.mxu0 0
        %1645 = vmatpush2.bf16.msra.mxu0 0
        %1646 = vmatprep.subr.bf16.mxu0 0
        %1647 = vmatpush2.bf16.msra.mxu0 0
        %1648 = vmatprep.subr.bf16.mxu0 0
        %1649 = vmatpush2.bf16.msra.mxu0 0
        %1650 = vmatprep.subr.bf16.mxu0 0
        %1651 = vmatpush2.bf16.msra.mxu0 0
        %1652 = vmatprep.subr.bf16.mxu0 0
        %1653 = vmatpush2.bf16.msra.mxu0 0
        %1654 = vmatprep.subr.bf16.mxu0 0
        %1655 = vmatpush2.bf16.msra.mxu0 0
        %1656 = vmatprep.subr.bf16.mxu0 0
        %1657 = vmatpush2.bf16.msra.mxu0 0
        %1658 = vmatprep.subr.bf16.mxu0 0
        %1659 = vmatpush2.bf16.msra.mxu0 0
        %1660 = vmatprep.mubr.bf16.mxu0 0
        %1661 = vmatmul.mubr.bf16.gmra.mxu0 %v1626
        %v1662 = vpop.f32.mrf.mxu0
        %v1663 = vadd.f32 %v1599, %v1662
        %v1664 = vpop.f32.mrf.mxu0
        %v1665 = vpop.f32.mrf.mxu0
        %v1666 = vadd.f32 %v1599, %v1665
        %v1667 = vpop.f32.mrf.mxu0
        %1668 = vdwg.mxu0
        %v1669 = vadd.f32 %v1480, %v1663
        %v1670 = vadd.f32 %v1481, %v1666
        %1671 = vst.msk [vmem:[#allocation7] sm:$0xff] %vm390, %v1669
        %1672 = vst.msk [vmem:[#allocation7 + $0x8] sm:$0xff] %vm390, %v1670
        // Predicated region
        $region57: #{tpu_custom_call.1} parent=43 // pred_check
          %p1673 = pneg %p208
        $region58: #{tpu_custom_call.1} parent=43 // pred_check_branch
          %1675 = sbr.rel (%p1673) target = $region60
        $region59: #{tpu_custom_call.1} parent=43 // pred_region
          %s1676 = smul.u32 2, %s26
          %s1678 = ssub.s32 256, 256
          %1679 = vsyncadd [#allocation4], %s1678
          %s1680 = smul.addr %s1676, 128
          %s1681 = scalar_lea.hbm %s6, %s1680
          %s1682 = sshll.u32 [#allocation7], 4
          %s1683 = int_to_ptr.vmem [resolvable:$true] %s1682
          %1688 = dma.vmem_to_hbm [thread:$0]  %s1683, 256, %s1681, [#allocation4], 128, 128, 8
        $region60: #{tpu_custom_call.1} parent=43 // pred_fallthru
          _
        // Predicated region
        $region61: #{tpu_custom_call.1} parent=43 // pred_check
          %p1689 = pneg %p208
        $region62: #{tpu_custom_call.1} parent=43 // pred_check_branch
          %1691 = sbr.rel (%p1689) target = $region64
        $region63: #{tpu_custom_call.1} parent=43 // pred_region
          %1692 = dma.done [#allocation4], 256
        $region64: #{tpu_custom_call.1} parent=43 // pred_fallthru
          _
      $region44: #{tpu_custom_call.1} parent=5 // pred_fallthru
        _
      %p1693 = scmp.le.s32.totalorder 2, %s17
      // Predicated region
      $region65: #{tpu_custom_call.1} parent=5 // pred_check
        %p1694 = pneg %p1693
      $region66: #{tpu_custom_call.1} parent=5 // pred_check_branch
        %1696 = sbr.rel (%p1694) target = $region68
      $region67: #{tpu_custom_call.1} parent=5 // pred_region
        %s1697 = ssub.s32 %s17, 2
      $region68: #{tpu_custom_call.1} parent=5 // pred_fallthru
        _
    $region6: #{tpu_custom_call.1} parent=1 // loop_footer
      %s21 = sadd.s32 1, %s17
    $region7: #{tpu_custom_call.1} parent=1 // loop_footer_branch
      %16 = sbr.rel target = $region3
    $region8: #{tpu_custom_call.1} parent=1 // loop_exit
      _
    %1698 = vsyncpa [#allocation3], 1
    %s1699 = scalar_lea.sflag [#allocation3], 1
    %1700 = vsyncpa %s1699, 1
    %1701 = vsyncpa [#allocation6], 1
    %s1702 = scalar_lea.sflag [#allocation6], 1
    %1703 = vsyncpa %s1702, 1
    %1704 = vsyncpa [#allocation4], 1
    %s1705 = scalar_lea.sflag [#allocation4], 1
    %1706 = vsyncpa %s1705, 1

</llo_original>
